<compile_context>
chip_gen: v5e
topology: v5e:2x2
jax: 0.10.0
libtpu: 0.0.40
codegen_flags: <defaults>
</compile_context>

<pallas_src>
import functools
import math

import jax
import jax.numpy as jnp
from jax.experimental import pallas as pl
from jax.experimental.pallas import tpu as pltpu

EPS = 1e-5  # nn.LayerNorm default


def _gelu(x):
    # TODO(synk): PyTorch nn.GELU default is exact erf; erf has no Mosaic
    # lowering, so the tanh approximation is used (max |diff| ~1e-3).
    c = math.sqrt(2.0 / math.pi)
    return 0.5 * x * (1.0 + jnp.tanh(c * (x + 0.044715 * x * x * x)))


def _layernorm(x, gamma, beta):
    mu = jnp.mean(x, axis=-1, keepdims=True)
    var = jnp.mean((x - mu) ** 2, axis=-1, keepdims=True)
    return (x - mu) * jax.lax.rsqrt(var + EPS) * gamma + beta


# ---------------------------------------------------------------------------
# Fused kernel, gridded over encoder layers.
#   step 0        : conv-as-matmul + ReLU, mean pooling, fusion MLP -> x_scr
#   every step    : one transformer encoder layer (weights streamed per layer)
#   last step     : policy/value/material heads (one lane-dense matmul)
# ---------------------------------------------------------------------------
def _hybrid_kernel(patches_ref, gnn_ref, wc_ref, w1_ref, fuse_vec_ref,
                   w_attn_ref, wo_ref, wf1_ref, wf2_ref, qkv_bias_ref,
                   enc_vec_e_ref, enc_vec_f_ref, w_heads_ref, b_heads_ref,
                   out_ref, x_scr,
                   *, nhead, policy_size, apply_encoder):
    f32 = jnp.float32
    bf16 = jnp.bfloat16
    l = pl.program_id(0)
    last = pl.num_programs(0) - 1
    S, E = x_scr.shape
    hw = patches_ref.shape[0] // S

    # --- step 0: CNN stand-in + pooling + fusion Linear/GELU/LayerNorm ------
    @pl.when(l == 0)
    def _():
        conv = jnp.dot(patches_ref[...], wc_ref[...],
                       preferred_element_type=f32)              # (S*HW, E)
        conv = jnp.maximum(conv + fuse_vec_ref[0:1, :], 0.0)
        # mean pooling as reshape + cross-sublane reduce (no pool matrices)
        cnn_pooled = jnp.mean(conv.reshape(S, hw, E), axis=1)   # (S, E)
        gnn_pooled = jnp.mean(gnn_ref[...], axis=1)             # (S, E)
        fused = jnp.concatenate([gnn_pooled, cnn_pooled], axis=1)  # (S, 2E)
        h = (jnp.dot(fused.astype(bf16), w1_ref[...],
                     preferred_element_type=f32) + fuse_vec_ref[1:2, :])
        x_scr[...] = _layernorm(_gelu(h), fuse_vec_ref[2:3, :],
                                fuse_vec_ref[3:4, :])

    # --- one encoder layer per grid step (post-norm, batch_first, batch=1) --
    if apply_encoder:
        dh = E // nhead
        scale = 1.0 / math.sqrt(dh)
        x = x_scr[...]                                          # (S, E) f32
        ve = enc_vec_e_ref[0]                                   # (6, E) f32

        # fused QKV: one (S,E)@(E,3E) bf16 matmul + one lane-dense bias add
        qkv = (jnp.dot(x.astype(bf16), w_attn_ref[0],
                       preferred_element_type=f32) + qkv_bias_ref[0])
        qf = qkv[:, 0:E] * scale
        kf = qkv[:, E:2 * E]
        vf = qkv[:, 2 * E:3 * E]

        heads = []
        for hh in range(nhead):                                 # static unroll
            c0 = hh * dh
            qh = qf[:, c0:c0 + dh].astype(bf16)
            kh = kf[:, c0:c0 + dh].astype(bf16)
            s = jax.lax.dot_general(qh, kh, (((1,), (1,)), ((), ())),
                                    preferred_element_type=f32)  # (S, S)
            s = s - jnp.max(s, axis=-1, keepdims=True)
            p = jnp.exp(s)
            p = p * pl.reciprocal(jnp.sum(p, axis=-1, keepdims=True),
                                  approx=True)
            heads.append(jnp.dot(p.astype(bf16),
                                 vf[:, c0:c0 + dh].astype(bf16),
                                 preferred_element_type=f32))    # (S, dh)
        attn_in = jnp.concatenate(heads, axis=1)                 # (S, E)
        # single (S,E)@(E,E) output projection (heads assembled along lanes)
        attn = (jnp.dot(attn_in.astype(bf16), wo_ref[0],
                        preferred_element_type=f32) + ve[0:1, :])
        x = _layernorm(x + attn, ve[1:2, :], ve[2:3, :])

        ff = _gelu(jnp.dot(x.astype(bf16), wf1_ref[0],
                           preferred_element_type=f32) + enc_vec_f_ref[0])
        ff = (jnp.dot(ff.astype(bf16), wf2_ref[0],
                      preferred_element_type=f32) + ve[3:4, :])
        x_scr[...] = _layernorm(x + ff, ve[4:5, :], ve[5:6, :])

    # --- last step: heads as one lane-dense matmul ---------------------------
    @pl.when(l == last)
    def _():
        y = (jnp.dot(x_scr[...].astype(bf16), w_heads_ref[...],
                     preferred_element_type=f32) + b_heads_ref[...])
        col = jax.lax.broadcasted_iota(jnp.int32, y.shape, 1)
        # tanh evaluated on the whole padded (S, 128) slab (one EUP pass) and
        # kept only on the value column; cheaper than a masked store.
        out_ref[...] = jnp.where(col == policy_size, jnp.tanh(y), y)


# ---------------------------------------------------------------------------
# Parameter init (deterministic, synthetic), packed / bf16 weight slabs.
# ---------------------------------------------------------------------------
def init_params(key, *, cnn_in_channels, embed_dim, policy_size, nhead,
                nlayers, dim_feedforward):
    e = embed_dim
    dff = dim_feedforward
    hp = ((policy_size + 2 + 127) // 128) * 128     # lane-dense heads width
    f32, bf16 = jnp.float32, jnp.bfloat16

    def nrm(k, shape, scale=0.05):
        return scale * jax.random.normal(k, shape, f32)

    keys = jax.random.split(key, 5 + nlayers)
    p = {"embed_dim": e, "nhead": nhead, "policy_size": policy_size,
         "head_pad": hp, "nlayers": nlayers, "dff": dff}

    p["wc"] = nrm(keys[0], (9 * cnn_in_channels, e)).astype(bf16)   # conv 3x3
    p["w1"] = nrm(keys[1], (2 * e, e)).astype(bf16)                 # fusion
    # rows: 0=conv bias, 1=fusion bias, 2=LN gamma, 3=LN beta
    p["fuse_vecs"] = jnp.stack([jnp.zeros(e), jnp.zeros(e),
                                jnp.ones(e), jnp.zeros(e)]).astype(f32)

    w_attn, wo, wf1, wf2, qkv_b, vec_e, vec_f = [], [], [], [], [], [], []
    for i in range(nlayers):
        lk = jax.random.split(keys[2 + i], 6)
        w_attn.append(jnp.concatenate(
            [nrm(lk[0], (e, e)), nrm(lk[1], (e, e)), nrm(lk[2], (e, e))],
            axis=1))                                  # (E, 3E) q|k|v
        wo.append(nrm(lk[3], (e, e)))
        wf1.append(nrm(lk[4], (e, dff)))
        wf2.append(nrm(lk[5], (dff, e)))
        qkv_b.append(jnp.zeros((1, 3 * e), f32))
        # rows: bo, ln1 gamma, ln1 beta, ff2 bias, ln2 gamma, ln2 beta
        vec_e.append(jnp.stack([jnp.zeros(e), jnp.ones(e), jnp.zeros(e),
                                jnp.zeros(e), jnp.ones(e), jnp.zeros(e)]))
        vec_f.append(jnp.zeros((1, dff), f32))
    p["w_attn"] = jnp.stack(w_attn).astype(bf16)      # (L, E, 3E)
    p["wo"] = jnp.stack(wo).astype(bf16)              # (L, E, E)
    p["wf1"] = jnp.stack(wf1).astype(bf16)            # (L, E, DFF)
    p["wf2"] = jnp.stack(wf2).astype(bf16)            # (L, DFF, E)
    p["qkv_bias"] = jnp.stack(qkv_b).astype(f32)      # (L, 1, 3E)
    p["enc_vec_e"] = jnp.stack(vec_e).astype(f32)     # (L, 6, E)
    p["enc_vec_f"] = jnp.stack(vec_f).astype(f32)     # (L, 1, DFF)

    # heads packed lane-dense: [policy | value | material | zero pad]
    wp = nrm(keys[2 + nlayers], (e, policy_size))
    wvh = nrm(keys[3 + nlayers], (e, 1))
    wm = nrm(keys[4 + nlayers], (e, 1))
    pad = jnp.zeros((e, hp - policy_size - 2), f32)
    p["w_heads"] = jnp.concatenate([wp, wvh, wm, pad], axis=1).astype(bf16)
    p["b_heads"] = jnp.zeros((1, hp), f32)
    return p


# ---------------------------------------------------------------------------
# Forward wrapper (glue in plain JAX, all compute in a single Pallas call).
# ---------------------------------------------------------------------------
def hybrid_forward(params, gnn_out, cnn_tensor):
    """gnn_out: (S*64, E) per-square node embeddings.
       cnn_tensor: (1, S, C, H, W) sequence mode, or (S, C, H, W) batch mode."""
    is_sequence = cnn_tensor.ndim == 5
    x = cnn_tensor[0] if is_sequence else cnn_tensor            # (S, C, H, W)
    S, C, H, W = x.shape
    E = params["embed_dim"]
    P = params["policy_size"]
    HP = params["head_pad"]
    L = params["nlayers"]

    # glue: NCHW -> NHWC, pad, im2col so the 3x3 conv becomes one matmul.
    # TODO(synk): on v5e this ~9x read inflation could be avoided by building
    # the 9 shifted views in-kernel (static slices / pltpu.roll).
    xh = jnp.transpose(x, (0, 2, 3, 1)).astype(jnp.float32)
    xp = jnp.pad(xh, ((0, 0), (1, 1), (1, 1), (0, 0)))
    pats = [xp[:, dy:dy + H, dx:dx + W, :]
            for dy in range(3) for dx in range(3)]
    patches = jnp.concatenate(pats, axis=-1).reshape(S * H * W, 9 * C)
    patches = patches.astype(jnp.bfloat16)
    gnn3 = gnn_out.astype(jnp.float32).reshape(S, 64, E)

    grid = (L,) if is_sequence else (1,)

    def full_spec(shape):
        zeros = (0,) * len(shape)
        return pl.BlockSpec(tuple(shape), lambda l: zeros)

    def layer_spec(shape):
        zeros = (0,) * (len(shape) - 1)
        return pl.BlockSpec((1,) + tuple(shape[1:]), lambda l: (l,) + zeros)

    in_specs = [
        full_spec(patches.shape), full_spec(gnn3.shape),
        full_spec(params["wc"].shape), full_spec(params["w1"].shape),
        full_spec(params["fuse_vecs"].shape),
        layer_spec(params["w_attn"].shape), layer_spec(params["wo"].shape),
        layer_spec(params["wf1"].shape), layer_spec(params["wf2"].shape),
        layer_spec(params["qkv_bias"].shape),
        layer_spec(params["enc_vec_e"].shape),
        layer_spec(params["enc_vec_f"].shape),
        full_spec(params["w_heads"].shape), full_spec(params["b_heads"].shape),
    ]
    out_spec = pl.BlockSpec((S, HP), lambda l: (0, 0))

    # VMEM budget sized from the actual resident footprint (fixed slabs + two
    # layers of double-buffered streamed weights), 2x headroom, capped under
    # v7x's 64 MiB physical VMEM.
    def nbytes(a):
        return int(a.size) * a.dtype.itemsize
    fixed = (nbytes(patches) + nbytes(gnn3) + nbytes(params["wc"])
             + nbytes(params["w1"]) + nbytes(params["fuse_vecs"])
             + nbytes(params["w_heads"]) + nbytes(params["b_heads"])
             + S * HP * 4 + S * E * 4)
    per_layer = sum(nbytes(params[k]) // L for k in
                    ("w_attn", "wo", "wf1", "wf2", "qkv_bias",
                     "enc_vec_e", "enc_vec_f"))
    vmem_limit = int(min(64 * 1024 * 1024,
                         2 * (fixed + 2 * per_layer) + (4 << 20)))

    kernel = functools.partial(_hybrid_kernel, nhead=params["nhead"],
                               policy_size=P, apply_encoder=is_sequence)
    out = pl.pallas_call(
        kernel,
        grid=grid,
        out_shape=jax.ShapeDtypeStruct((S, HP), jnp.float32),
        in_specs=in_specs,
        out_specs=out_spec,
        scratch_shapes=[pltpu.VMEM((S, E), jnp.float32)],
        compiler_params=pltpu.CompilerParams(
            dimension_semantics=("arbitrary",),
            vmem_limit_bytes=vmem_limit),
    )(patches, gnn3, params["wc"], params["w1"], params["fuse_vecs"],
      params["w_attn"], params["wo"], params["wf1"], params["wf2"],
      params["qkv_bias"], params["enc_vec_e"], params["enc_vec_f"],
      params["w_heads"], params["b_heads"])

    policy = out[:, :P]
    value = out[:, P:P + 1]
    material = out[:, P + 1:P + 2]
    return policy, value, material


if __name__ == "__main__":
    # small shapes: seq=8 board states, 4 input planes, 8x8 board, embed_dim=32
    S, C, H, W = 8, 4, 8, 8
    EMBED, POLICY = 32, 16
    NHEAD, NLAYERS, DFF = 4, 2, 64

    key = jax.random.PRNGKey(0)
    kp, kg, kc = jax.random.split(key, 3)

    params = init_params(kp, cnn_in_channels=C, embed_dim=EMBED,
                         policy_size=POLICY, nhead=NHEAD, nlayers=NLAYERS,
                         dim_feedforward=DFF)

    # precomputed GNN node embeddings: 64 squares per board state
    gnn_out = jax.random.normal(kg, (S * 64, EMBED), jnp.float32)
    # sequence mode input: (1, S, C, H, W), NCHW like PyTorch
    cnn_tensor = jax.random.normal(kc, (1, S, C, H, W), jnp.float32)

    # sequence mode (training): transformer encoder applied
    policy, value, material = hybrid_forward(params, gnn_out, cnn_tensor)
    jax.block_until_ready((policy, value, material))
    assert policy.shape == (S, POLICY)
    assert value.shape == (S, 1)
    assert material.shape == (S, 1)

    # batch mode (MCTS inference, 4-D input): transformer encoder bypassed,
    # matching the reference module's polymorphic forward.
    policy_b, value_b, material_b = hybrid_forward(params, gnn_out,
                                                   cnn_tensor[0])
    jax.block_until_ready((policy_b, value_b, material_b))
    assert policy_b.shape == (S, POLICY)
    assert value_b.shape == (S, 1)
    assert material_b.shape == (S, 1)

    print("KERNEL_OK")
</pallas_src>

<mosaic_0001>
module attributes {stable_mosaic.version = 11 : i64} {
  func.func @_hybrid_kernel(%arg0: i32, %arg1: memref<512x36xbf16, #tpu.memory_space<vmem>>, %arg2: memref<8x64x32xf32, #tpu.memory_space<vmem>>, %arg3: memref<36x32xbf16, #tpu.memory_space<vmem>>, %arg4: memref<64x32xbf16, #tpu.memory_space<vmem>>, %arg5: memref<4x32xf32, #tpu.memory_space<vmem>>, %arg6: memref<1x32x96xbf16, #tpu.memory_space<vmem>>, %arg7: memref<1x32x32xbf16, #tpu.memory_space<vmem>>, %arg8: memref<1x32x64xbf16, #tpu.memory_space<vmem>>, %arg9: memref<1x64x32xbf16, #tpu.memory_space<vmem>>, %arg10: memref<1x1x96xf32, #tpu.memory_space<vmem>>, %arg11: memref<1x6x32xf32, #tpu.memory_space<vmem>>, %arg12: memref<1x1x64xf32, #tpu.memory_space<vmem>>, %arg13: memref<32x128xbf16, #tpu.memory_space<vmem>>, %arg14: memref<1x128xf32, #tpu.memory_space<vmem>>, %arg15: memref<8x128xf32, #tpu.memory_space<vmem>>, %arg16: memref<8x32xf32, #tpu.memory_space<vmem>>) attributes {dimension_semantics = [#tpu.dimension_semantics<arbitrary>], iteration_bounds = array<i64: 2>, scalar_prefetch = 0 : i64, scratch_operands = 1 : i64, tpu.core_type = #tpu.core_type<tc>, window_params = [{pipeline_mode = #tpu.pipeline_mode<synchronous>, transform_indices = @transform_0, window_bounds = array<i64: 512, 36>}, {pipeline_mode = #tpu.pipeline_mode<synchronous>, transform_indices = @transform_1, window_bounds = array<i64: 8, 64, 32>}, {pipeline_mode = #tpu.pipeline_mode<synchronous>, transform_indices = @transform_2, window_bounds = array<i64: 36, 32>}, {pipeline_mode = #tpu.pipeline_mode<synchronous>, transform_indices = @transform_3, window_bounds = array<i64: 64, 32>}, {pipeline_mode = #tpu.pipeline_mode<synchronous>, transform_indices = @transform_4, window_bounds = array<i64: 4, 32>}, {transform_indices = @transform_5, window_bounds = array<i64: 1, 32, 96>}, {transform_indices = @transform_6, window_bounds = array<i64: 1, 32, 32>}, {transform_indices = @transform_7, window_bounds = array<i64: 1, 32, 64>}, {transform_indices = @transform_8, window_bounds = array<i64: 1, 64, 32>}, {transform_indices = @transform_9, window_bounds = array<i64: 1, 1, 96>}, {transform_indices = @transform_10, window_bounds = array<i64: 1, 6, 32>}, {transform_indices = @transform_11, window_bounds = array<i64: 1, 1, 64>}, {pipeline_mode = #tpu.pipeline_mode<synchronous>, transform_indices = @transform_12, window_bounds = array<i64: 32, 128>}, {pipeline_mode = #tpu.pipeline_mode<synchronous>, transform_indices = @transform_13, window_bounds = array<i64: 1, 128>}, {pipeline_mode = #tpu.pipeline_mode<synchronous>, transform_indices = @transform_14, window_bounds = array<i64: 8, 128>}]} {
    %c0_i32 = arith.constant 0 : i32
    %0 = arith.cmpi eq, %arg0, %c0_i32 : i32
    %1 = arith.extui %0 : i1 to i32
    %c0_i32_0 = arith.constant 0 : i32
    %2 = arith.cmpi ne, %1, %c0_i32_0 : i32
    scf.if %2 {
      %c0_60 = arith.constant 0 : index
      %c0_61 = arith.constant 0 : index
      %185 = vector.load %arg1[%c0_60, %c0_61] : memref<512x36xbf16, #tpu.memory_space<vmem>>, vector<512x36xbf16>
      %c0_62 = arith.constant 0 : index
      %c0_63 = arith.constant 0 : index
      %186 = vector.load %arg3[%c0_62, %c0_63] : memref<36x32xbf16, #tpu.memory_space<vmem>>, vector<36x32xbf16>
      %cst_64 = arith.constant dense<0.000000e+00> : vector<512x32xf32>
      %187 = tpu.matmul %185, %186, %cst_64 {dimension_numbers = #tpu.dot_dimension_numbers<[1], [0], [0], [1], [0, 0, 1, 1], [], []>} : vector<512x36xbf16>, vector<36x32xbf16>, vector<512x32xf32> -> vector<512x32xf32>
      %c0_65 = arith.constant 0 : index
      %c0_66 = arith.constant 0 : index
      %188 = vector.load %arg5[%c0_65, %c0_66] : memref<4x32xf32, #tpu.memory_space<vmem>>, vector<1x32xf32>
      %189 = vector.broadcast %188 : vector<1x32xf32> to vector<512x32xf32>
      %190 = arith.addf %187, %189 : vector<512x32xf32>
      %cst_67 = arith.constant 0.000000e+00 : f32
      %191 = vector.broadcast %cst_67 : f32 to vector<512x32xf32>
      %192 = arith.maximumf %190, %191 : vector<512x32xf32>
      %193 = vector.shape_cast %192 : vector<512x32xf32> to vector<8x64x32xf32>
      %cst_68 = arith.constant dense<0.000000e+00> : vector<8x32xf32>
      %194 = vector.multi_reduction <add>, %193, %cst_68 [1] : vector<8x64x32xf32> to vector<8x32xf32>
      %cst_69 = arith.constant 6.400000e+01 : f32
      %195 = vector.broadcast %cst_69 : f32 to vector<8x32xf32>
      %196 = arith.divf %194, %195 : vector<8x32xf32>
      %c0_70 = arith.constant 0 : index
      %c0_71 = arith.constant 0 : index
      %c0_72 = arith.constant 0 : index
      %197 = vector.load %arg2[%c0_70, %c0_71, %c0_72] : memref<8x64x32xf32, #tpu.memory_space<vmem>>, vector<8x64x32xf32>
      %cst_73 = arith.constant dense<0.000000e+00> : vector<8x32xf32>
      %198 = vector.multi_reduction <add>, %197, %cst_73 [1] : vector<8x64x32xf32> to vector<8x32xf32>
      %cst_74 = arith.constant 6.400000e+01 : f32
      %199 = vector.broadcast %cst_74 : f32 to vector<8x32xf32>
      %200 = arith.divf %198, %199 : vector<8x32xf32>
      %201 = tpu.concatenate %200, %196 in 1 : vector<8x32xf32>, vector<8x32xf32> -> vector<8x64xf32>
      %202 = arith.truncf %201 : vector<8x64xf32> to vector<8x64xbf16>
      %c0_75 = arith.constant 0 : index
      %c0_76 = arith.constant 0 : index
      %203 = vector.load %arg4[%c0_75, %c0_76] : memref<64x32xbf16, #tpu.memory_space<vmem>>, vector<64x32xbf16>
      %cst_77 = arith.constant dense<0.000000e+00> : vector<8x32xf32>
      %204 = tpu.matmul %202, %203, %cst_77 {dimension_numbers = #tpu.dot_dimension_numbers<[1], [0], [0], [1], [0, 0, 1, 1], [], []>} : vector<8x64xbf16>, vector<64x32xbf16>, vector<8x32xf32> -> vector<8x32xf32>
      %c1 = arith.constant 1 : index
      %c0_78 = arith.constant 0 : index
      %205 = vector.load %arg5[%c1, %c0_78] : memref<4x32xf32, #tpu.memory_space<vmem>>, vector<1x32xf32>
      %206 = vector.broadcast %205 : vector<1x32xf32> to vector<8x32xf32>
      %207 = arith.addf %204, %206 : vector<8x32xf32>
      %cst_79 = arith.constant 5.000000e-01 : f32
      %208 = vector.broadcast %cst_79 : f32 to vector<8x32xf32>
      %209 = arith.mulf %208, %207 : vector<8x32xf32>
      %cst_80 = arith.constant 4.471500e-02 : f32
      %210 = vector.broadcast %cst_80 : f32 to vector<8x32xf32>
      %211 = arith.mulf %210, %207 : vector<8x32xf32>
      %212 = arith.mulf %211, %207 : vector<8x32xf32>
      %213 = arith.mulf %212, %207 : vector<8x32xf32>
      %214 = arith.addf %207, %213 : vector<8x32xf32>
      %cst_81 = arith.constant 0.797884583 : f32
      %215 = vector.broadcast %cst_81 : f32 to vector<8x32xf32>
      %216 = arith.mulf %215, %214 : vector<8x32xf32>
      %217 = math.tanh %216 : vector<8x32xf32>
      %cst_82 = arith.constant 1.000000e+00 : f32
      %218 = vector.broadcast %cst_82 : f32 to vector<8x32xf32>
      %219 = arith.addf %218, %217 : vector<8x32xf32>
      %220 = arith.mulf %209, %219 : vector<8x32xf32>
      %c2 = arith.constant 2 : index
      %c0_83 = arith.constant 0 : index
      %221 = vector.load %arg5[%c2, %c0_83] : memref<4x32xf32, #tpu.memory_space<vmem>>, vector<1x32xf32>
      %c3 = arith.constant 3 : index
      %c0_84 = arith.constant 0 : index
      %222 = vector.load %arg5[%c3, %c0_84] : memref<4x32xf32, #tpu.memory_space<vmem>>, vector<1x32xf32>
      %cst_85 = arith.constant dense<0.000000e+00> : vector<8xf32>
      %223 = vector.multi_reduction <add>, %220, %cst_85 [1] : vector<8x32xf32> to vector<8xf32>
      %224 = vector.shape_cast %223 : vector<8xf32> to vector<8x1xf32>
      %cst_86 = arith.constant 3.200000e+01 : f32
      %225 = vector.broadcast %cst_86 : f32 to vector<8x1xf32>
      %226 = arith.divf %224, %225 : vector<8x1xf32>
      %227 = vector.broadcast %226 : vector<8x1xf32> to vector<8x32xf32>
      %228 = arith.subf %220, %227 : vector<8x32xf32>
      %229 = arith.mulf %228, %228 : vector<8x32xf32>
      %cst_87 = arith.constant dense<0.000000e+00> : vector<8xf32>
      %230 = vector.multi_reduction <add>, %229, %cst_87 [1] : vector<8x32xf32> to vector<8xf32>
      %231 = vector.shape_cast %230 : vector<8xf32> to vector<8x1xf32>
      %cst_88 = arith.constant 3.200000e+01 : f32
      %232 = vector.broadcast %cst_88 : f32 to vector<8x1xf32>
      %233 = arith.divf %231, %232 : vector<8x1xf32>
      %234 = vector.broadcast %226 : vector<8x1xf32> to vector<8x32xf32>
      %235 = arith.subf %220, %234 : vector<8x32xf32>
      %cst_89 = arith.constant 9.99999974E-6 : f32
      %236 = vector.broadcast %cst_89 : f32 to vector<8x1xf32>
      %237 = arith.addf %233, %236 : vector<8x1xf32>
      %238 = math.rsqrt %237 : vector<8x1xf32>
      %239 = vector.broadcast %238 : vector<8x1xf32> to vector<8x32xf32>
      %240 = arith.mulf %235, %239 : vector<8x32xf32>
      %241 = vector.broadcast %221 : vector<1x32xf32> to vector<8x32xf32>
      %242 = arith.mulf %240, %241 : vector<8x32xf32>
      %243 = vector.broadcast %222 : vector<1x32xf32> to vector<8x32xf32>
      %244 = arith.addf %242, %243 : vector<8x32xf32>
      %c0_90 = arith.constant 0 : index
      %c0_91 = arith.constant 0 : index
      %245 = vector.load %arg16[%c0_90, %c0_91] : memref<8x32xf32, #tpu.memory_space<vmem>>, vector<8x32xf32>
      tpu.vector_store %arg16[%c0_90, %c0_91], %244 {strides = array<i32>} : memref<8x32xf32, #tpu.memory_space<vmem>>, vector<8x32xf32>,
    } else {
    }
    %c0 = arith.constant 0 : index
    %c0_1 = arith.constant 0 : index
    %3 = vector.load %arg16[%c0, %c0_1] : memref<8x32xf32, #tpu.memory_space<vmem>>, vector<8x32xf32>
    %c0_2 = arith.constant 0 : index
    %c0_3 = arith.constant 0 : index
    %c0_4 = arith.constant 0 : index
    %4 = vector.load %arg11[%c0_2, %c0_3, %c0_4] : memref<1x6x32xf32, #tpu.memory_space<vmem>>, vector<1x6x32xf32>
    %5 = vector.shape_cast %4 : vector<1x6x32xf32> to vector<6x32xf32>
    %6 = arith.truncf %3 : vector<8x32xf32> to vector<8x32xbf16>
    %c0_5 = arith.constant 0 : index
    %c0_6 = arith.constant 0 : index
    %c0_7 = arith.constant 0 : index
    %7 = vector.load %arg6[%c0_5, %c0_6, %c0_7] : memref<1x32x96xbf16, #tpu.memory_space<vmem>>, vector<1x32x96xbf16>
    %8 = vector.shape_cast %7 : vector<1x32x96xbf16> to vector<32x96xbf16>
    %cst = arith.constant dense<0.000000e+00> : vector<8x96xf32>
    %9 = tpu.matmul %6, %8, %cst {dimension_numbers = #tpu.dot_dimension_numbers<[1], [0], [0], [1], [0, 0, 1, 1], [], []>} : vector<8x32xbf16>, vector<32x96xbf16>, vector<8x96xf32> -> vector<8x96xf32>
    %c0_8 = arith.constant 0 : index
    %c0_9 = arith.constant 0 : index
    %c0_10 = arith.constant 0 : index
    %10 = vector.load %arg10[%c0_8, %c0_9, %c0_10] : memref<1x1x96xf32, #tpu.memory_space<vmem>>, vector<1x1x96xf32>
    %11 = vector.shape_cast %10 : vector<1x1x96xf32> to vector<1x96xf32>
    %12 = vector.broadcast %11 : vector<1x96xf32> to vector<8x96xf32>
    %13 = arith.addf %9, %12 : vector<8x96xf32>
    %14 = vector.extract_strided_slice %13 {offsets = [0, 0], sizes = [8, 32], strides = [1, 1]} : vector<8x96xf32> to vector<8x32xf32>
    %cst_11 = arith.constant 0.353553385 : f32
    %15 = vector.broadcast %cst_11 : f32 to vector<8x32xf32>
    %16 = arith.mulf %14, %15 : vector<8x32xf32>
    %17 = vector.extract_strided_slice %13 {offsets = [0, 32], sizes = [8, 32], strides = [1, 1]} : vector<8x96xf32> to vector<8x32xf32>
    %18 = vector.extract_strided_slice %13 {offsets = [0, 64], sizes = [8, 32], strides = [1, 1]} : vector<8x96xf32> to vector<8x32xf32>
    %19 = vector.extract_strided_slice %16 {offsets = [0, 0], sizes = [8, 8], strides = [1, 1]} : vector<8x32xf32> to vector<8x8xf32>
    %20 = arith.truncf %19 : vector<8x8xf32> to vector<8x8xbf16>
    %21 = vector.extract_strided_slice %17 {offsets = [0, 0], sizes = [8, 8], strides = [1, 1]} : vector<8x32xf32> to vector<8x8xf32>
    %22 = arith.truncf %21 : vector<8x8xf32> to vector<8x8xbf16>
    %cst_12 = arith.constant dense<0.000000e+00> : vector<8x8xf32>
    %23 = tpu.matmul %20, %22, %cst_12 {dimension_numbers = #tpu.dot_dimension_numbers<[1], [1], [0], [0], [0, 0, 1, 0], [], []>} : vector<8x8xbf16>, vector<8x8xbf16>, vector<8x8xf32> -> vector<8x8xf32>
    %cst_13 = arith.constant dense<0xFF800000> : vector<8xf32>
    %24 = vector.multi_reduction <maximumf>, %23, %cst_13 [1] : vector<8x8xf32> to vector<8xf32>
    %25 = vector.shape_cast %24 : vector<8xf32> to vector<8x1xf32>
    %26 = vector.broadcast %25 : vector<8x1xf32> to vector<8x8xf32>
    %27 = arith.subf %23, %26 : vector<8x8xf32>
    %28 = math.exp %27 : vector<8x8xf32>
    %cst_14 = arith.constant dense<0.000000e+00> : vector<8xf32>
    %29 = vector.multi_reduction <add>, %28, %cst_14 [1] : vector<8x8xf32> to vector<8xf32>
    %30 = vector.shape_cast %29 : vector<8xf32> to vector<8x1xf32>
    %31 = tpu.reciprocal %30 {approx = true} : vector<8x1xf32> -> vector<8x1xf32>
    %32 = vector.broadcast %31 : vector<8x1xf32> to vector<8x8xf32>
    %33 = arith.mulf %28, %32 : vector<8x8xf32>
    %34 = arith.truncf %33 : vector<8x8xf32> to vector<8x8xbf16>
    %35 = vector.extract_strided_slice %18 {offsets = [0, 0], sizes = [8, 8], strides = [1, 1]} : vector<8x32xf32> to vector<8x8xf32>
    %36 = arith.truncf %35 : vector<8x8xf32> to vector<8x8xbf16>
    %cst_15 = arith.constant dense<0.000000e+00> : vector<8x8xf32>
    %37 = tpu.matmul %34, %36, %cst_15 {dimension_numbers = #tpu.dot_dimension_numbers<[1], [0], [0], [1], [0, 0, 1, 1], [], []>} : vector<8x8xbf16>, vector<8x8xbf16>, vector<8x8xf32> -> vector<8x8xf32>
    %38 = vector.extract_strided_slice %16 {offsets = [0, 8], sizes = [8, 8], strides = [1, 1]} : vector<8x32xf32> to vector<8x8xf32>
    %39 = arith.truncf %38 : vector<8x8xf32> to vector<8x8xbf16>
    %40 = vector.extract_strided_slice %17 {offsets = [0, 8], sizes = [8, 8], strides = [1, 1]} : vector<8x32xf32> to vector<8x8xf32>
    %41 = arith.truncf %40 : vector<8x8xf32> to vector<8x8xbf16>
    %cst_16 = arith.constant dense<0.000000e+00> : vector<8x8xf32>
    %42 = tpu.matmul %39, %41, %cst_16 {dimension_numbers = #tpu.dot_dimension_numbers<[1], [1], [0], [0], [0, 0, 1, 0], [], []>} : vector<8x8xbf16>, vector<8x8xbf16>, vector<8x8xf32> -> vector<8x8xf32>
    %cst_17 = arith.constant dense<0xFF800000> : vector<8xf32>
    %43 = vector.multi_reduction <maximumf>, %42, %cst_17 [1] : vector<8x8xf32> to vector<8xf32>
    %44 = vector.shape_cast %43 : vector<8xf32> to vector<8x1xf32>
    %45 = vector.broadcast %44 : vector<8x1xf32> to vector<8x8xf32>
    %46 = arith.subf %42, %45 : vector<8x8xf32>
    %47 = math.exp %46 : vector<8x8xf32>
    %cst_18 = arith.constant dense<0.000000e+00> : vector<8xf32>
    %48 = vector.multi_reduction <add>, %47, %cst_18 [1] : vector<8x8xf32> to vector<8xf32>
    %49 = vector.shape_cast %48 : vector<8xf32> to vector<8x1xf32>
    %50 = tpu.reciprocal %49 {approx = true} : vector<8x1xf32> -> vector<8x1xf32>
    %51 = vector.broadcast %50 : vector<8x1xf32> to vector<8x8xf32>
    %52 = arith.mulf %47, %51 : vector<8x8xf32>
    %53 = arith.truncf %52 : vector<8x8xf32> to vector<8x8xbf16>
    %54 = vector.extract_strided_slice %18 {offsets = [0, 8], sizes = [8, 8], strides = [1, 1]} : vector<8x32xf32> to vector<8x8xf32>
    %55 = arith.truncf %54 : vector<8x8xf32> to vector<8x8xbf16>
    %cst_19 = arith.constant dense<0.000000e+00> : vector<8x8xf32>
    %56 = tpu.matmul %53, %55, %cst_19 {dimension_numbers = #tpu.dot_dimension_numbers<[1], [0], [0], [1], [0, 0, 1, 1], [], []>} : vector<8x8xbf16>, vector<8x8xbf16>, vector<8x8xf32> -> vector<8x8xf32>
    %57 = vector.extract_strided_slice %16 {offsets = [0, 16], sizes = [8, 8], strides = [1, 1]} : vector<8x32xf32> to vector<8x8xf32>
    %58 = arith.truncf %57 : vector<8x8xf32> to vector<8x8xbf16>
    %59 = vector.extract_strided_slice %17 {offsets = [0, 16], sizes = [8, 8], strides = [1, 1]} : vector<8x32xf32> to vector<8x8xf32>
    %60 = arith.truncf %59 : vector<8x8xf32> to vector<8x8xbf16>
    %cst_20 = arith.constant dense<0.000000e+00> : vector<8x8xf32>
    %61 = tpu.matmul %58, %60, %cst_20 {dimension_numbers = #tpu.dot_dimension_numbers<[1], [1], [0], [0], [0, 0, 1, 0], [], []>} : vector<8x8xbf16>, vector<8x8xbf16>, vector<8x8xf32> -> vector<8x8xf32>
    %cst_21 = arith.constant dense<0xFF800000> : vector<8xf32>
    %62 = vector.multi_reduction <maximumf>, %61, %cst_21 [1] : vector<8x8xf32> to vector<8xf32>
    %63 = vector.shape_cast %62 : vector<8xf32> to vector<8x1xf32>
    %64 = vector.broadcast %63 : vector<8x1xf32> to vector<8x8xf32>
    %65 = arith.subf %61, %64 : vector<8x8xf32>
    %66 = math.exp %65 : vector<8x8xf32>
    %cst_22 = arith.constant dense<0.000000e+00> : vector<8xf32>
    %67 = vector.multi_reduction <add>, %66, %cst_22 [1] : vector<8x8xf32> to vector<8xf32>
    %68 = vector.shape_cast %67 : vector<8xf32> to vector<8x1xf32>
    %69 = tpu.reciprocal %68 {approx = true} : vector<8x1xf32> -> vector<8x1xf32>
    %70 = vector.broadcast %69 : vector<8x1xf32> to vector<8x8xf32>
    %71 = arith.mulf %66, %70 : vector<8x8xf32>
    %72 = arith.truncf %71 : vector<8x8xf32> to vector<8x8xbf16>
    %73 = vector.extract_strided_slice %18 {offsets = [0, 16], sizes = [8, 8], strides = [1, 1]} : vector<8x32xf32> to vector<8x8xf32>
    %74 = arith.truncf %73 : vector<8x8xf32> to vector<8x8xbf16>
    %cst_23 = arith.constant dense<0.000000e+00> : vector<8x8xf32>
    %75 = tpu.matmul %72, %74, %cst_23 {dimension_numbers = #tpu.dot_dimension_numbers<[1], [0], [0], [1], [0, 0, 1, 1], [], []>} : vector<8x8xbf16>, vector<8x8xbf16>, vector<8x8xf32> -> vector<8x8xf32>
    %76 = vector.extract_strided_slice %16 {offsets = [0, 24], sizes = [8, 8], strides = [1, 1]} : vector<8x32xf32> to vector<8x8xf32>
    %77 = arith.truncf %76 : vector<8x8xf32> to vector<8x8xbf16>
    %78 = vector.extract_strided_slice %17 {offsets = [0, 24], sizes = [8, 8], strides = [1, 1]} : vector<8x32xf32> to vector<8x8xf32>
    %79 = arith.truncf %78 : vector<8x8xf32> to vector<8x8xbf16>
    %cst_24 = arith.constant dense<0.000000e+00> : vector<8x8xf32>
    %80 = tpu.matmul %77, %79, %cst_24 {dimension_numbers = #tpu.dot_dimension_numbers<[1], [1], [0], [0], [0, 0, 1, 0], [], []>} : vector<8x8xbf16>, vector<8x8xbf16>, vector<8x8xf32> -> vector<8x8xf32>
    %cst_25 = arith.constant dense<0xFF800000> : vector<8xf32>
    %81 = vector.multi_reduction <maximumf>, %80, %cst_25 [1] : vector<8x8xf32> to vector<8xf32>
    %82 = vector.shape_cast %81 : vector<8xf32> to vector<8x1xf32>
    %83 = vector.broadcast %82 : vector<8x1xf32> to vector<8x8xf32>
    %84 = arith.subf %80, %83 : vector<8x8xf32>
    %85 = math.exp %84 : vector<8x8xf32>
    %cst_26 = arith.constant dense<0.000000e+00> : vector<8xf32>
    %86 = vector.multi_reduction <add>, %85, %cst_26 [1] : vector<8x8xf32> to vector<8xf32>
    %87 = vector.shape_cast %86 : vector<8xf32> to vector<8x1xf32>
    %88 = tpu.reciprocal %87 {approx = true} : vector<8x1xf32> -> vector<8x1xf32>
    %89 = vector.broadcast %88 : vector<8x1xf32> to vector<8x8xf32>
    %90 = arith.mulf %85, %89 : vector<8x8xf32>
    %91 = arith.truncf %90 : vector<8x8xf32> to vector<8x8xbf16>
    %92 = vector.extract_strided_slice %18 {offsets = [0, 24], sizes = [8, 8], strides = [1, 1]} : vector<8x32xf32> to vector<8x8xf32>
    %93 = arith.truncf %92 : vector<8x8xf32> to vector<8x8xbf16>
    %cst_27 = arith.constant dense<0.000000e+00> : vector<8x8xf32>
    %94 = tpu.matmul %91, %93, %cst_27 {dimension_numbers = #tpu.dot_dimension_numbers<[1], [0], [0], [1], [0, 0, 1, 1], [], []>} : vector<8x8xbf16>, vector<8x8xbf16>, vector<8x8xf32> -> vector<8x8xf32>
    %95 = tpu.concatenate %37, %56, %75, %94 in 1 : vector<8x8xf32>, vector<8x8xf32>, vector<8x8xf32>, vector<8x8xf32> -> vector<8x32xf32>
    %96 = arith.truncf %95 : vector<8x32xf32> to vector<8x32xbf16>
    %c0_28 = arith.constant 0 : index
    %c0_29 = arith.constant 0 : index
    %c0_30 = arith.constant 0 : index
    %97 = vector.load %arg7[%c0_28, %c0_29, %c0_30] : memref<1x32x32xbf16, #tpu.memory_space<vmem>>, vector<1x32x32xbf16>
    %98 = vector.shape_cast %97 : vector<1x32x32xbf16> to vector<32x32xbf16>
    %cst_31 = arith.constant dense<0.000000e+00> : vector<8x32xf32>
    %99 = tpu.matmul %96, %98, %cst_31 {dimension_numbers = #tpu.dot_dimension_numbers<[1], [0], [0], [1], [0, 0, 1, 1], [], []>} : vector<8x32xbf16>, vector<32x32xbf16>, vector<8x32xf32> -> vector<8x32xf32>
    %100 = vector.extract_strided_slice %5 {offsets = [0, 0], sizes = [1, 32], strides = [1, 1]} : vector<6x32xf32> to vector<1x32xf32>
    %101 = vector.broadcast %100 : vector<1x32xf32> to vector<8x32xf32>
    %102 = arith.addf %99, %101 : vector<8x32xf32>
    %103 = arith.addf %3, %102 : vector<8x32xf32>
    %104 = vector.extract_strided_slice %5 {offsets = [1, 0], sizes = [1, 32], strides = [1, 1]} : vector<6x32xf32> to vector<1x32xf32>
    %105 = vector.extract_strided_slice %5 {offsets = [2, 0], sizes = [1, 32], strides = [1, 1]} : vector<6x32xf32> to vector<1x32xf32>
    %cst_32 = arith.constant dense<0.000000e+00> : vector<8xf32>
    %106 = vector.multi_reduction <add>, %103, %cst_32 [1] : vector<8x32xf32> to vector<8xf32>
    %107 = vector.shape_cast %106 : vector<8xf32> to vector<8x1xf32>
    %cst_33 = arith.constant 3.200000e+01 : f32
    %108 = vector.broadcast %cst_33 : f32 to vector<8x1xf32>
    %109 = arith.divf %107, %108 : vector<8x1xf32>
    %110 = vector.broadcast %109 : vector<8x1xf32> to vector<8x32xf32>
    %111 = arith.subf %103, %110 : vector<8x32xf32>
    %112 = arith.mulf %111, %111 : vector<8x32xf32>
    %cst_34 = arith.constant dense<0.000000e+00> : vector<8xf32>
    %113 = vector.multi_reduction <add>, %112, %cst_34 [1] : vector<8x32xf32> to vector<8xf32>
    %114 = vector.shape_cast %113 : vector<8xf32> to vector<8x1xf32>
    %cst_35 = arith.constant 3.200000e+01 : f32
    %115 = vector.broadcast %cst_35 : f32 to vector<8x1xf32>
    %116 = arith.divf %114, %115 : vector<8x1xf32>
    %117 = vector.broadcast %109 : vector<8x1xf32> to vector<8x32xf32>
    %118 = arith.subf %103, %117 : vector<8x32xf32>
    %cst_36 = arith.constant 9.99999974E-6 : f32
    %119 = vector.broadcast %cst_36 : f32 to vector<8x1xf32>
    %120 = arith.addf %116, %119 : vector<8x1xf32>
    %121 = math.rsqrt %120 : vector<8x1xf32>
    %122 = vector.broadcast %121 : vector<8x1xf32> to vector<8x32xf32>
    %123 = arith.mulf %118, %122 : vector<8x32xf32>
    %124 = vector.broadcast %104 : vector<1x32xf32> to vector<8x32xf32>
    %125 = arith.mulf %123, %124 : vector<8x32xf32>
    %126 = vector.broadcast %105 : vector<1x32xf32> to vector<8x32xf32>
    %127 = arith.addf %125, %126 : vector<8x32xf32>
    %128 = arith.truncf %127 : vector<8x32xf32> to vector<8x32xbf16>
    %c0_37 = arith.constant 0 : index
    %c0_38 = arith.constant 0 : index
    %c0_39 = arith.constant 0 : index
    %129 = vector.load %arg8[%c0_37, %c0_38, %c0_39] : memref<1x32x64xbf16, #tpu.memory_space<vmem>>, vector<1x32x64xbf16>
    %130 = vector.shape_cast %129 : vector<1x32x64xbf16> to vector<32x64xbf16>
    %cst_40 = arith.constant dense<0.000000e+00> : vector<8x64xf32>
    %131 = tpu.matmul %128, %130, %cst_40 {dimension_numbers = #tpu.dot_dimension_numbers<[1], [0], [0], [1], [0, 0, 1, 1], [], []>} : vector<8x32xbf16>, vector<32x64xbf16>, vector<8x64xf32> -> vector<8x64xf32>
    %c0_41 = arith.constant 0 : index
    %c0_42 = arith.constant 0 : index
    %c0_43 = arith.constant 0 : index
    %132 = vector.load %arg12[%c0_41, %c0_42, %c0_43] : memref<1x1x64xf32, #tpu.memory_space<vmem>>, vector<1x1x64xf32>
    %133 = vector.shape_cast %132 : vector<1x1x64xf32> to vector<1x64xf32>
    %134 = vector.broadcast %133 : vector<1x64xf32> to vector<8x64xf32>
    %135 = arith.addf %131, %134 : vector<8x64xf32>
    %cst_44 = arith.constant 5.000000e-01 : f32
    %136 = vector.broadcast %cst_44 : f32 to vector<8x64xf32>
    %137 = arith.mulf %136, %135 : vector<8x64xf32>
    %cst_45 = arith.constant 4.471500e-02 : f32
    %138 = vector.broadcast %cst_45 : f32 to vector<8x64xf32>
    %139 = arith.mulf %138, %135 : vector<8x64xf32>
    %140 = arith.mulf %139, %135 : vector<8x64xf32>
    %141 = arith.mulf %140, %135 : vector<8x64xf32>
    %142 = arith.addf %135, %141 : vector<8x64xf32>
    %cst_46 = arith.constant 0.797884583 : f32
    %143 = vector.broadcast %cst_46 : f32 to vector<8x64xf32>
    %144 = arith.mulf %143, %142 : vector<8x64xf32>
    %145 = math.tanh %144 : vector<8x64xf32>
    %cst_47 = arith.constant 1.000000e+00 : f32
    %146 = vector.broadcast %cst_47 : f32 to vector<8x64xf32>
    %147 = arith.addf %146, %145 : vector<8x64xf32>
    %148 = arith.mulf %137, %147 : vector<8x64xf32>
    %149 = arith.truncf %148 : vector<8x64xf32> to vector<8x64xbf16>
    %c0_48 = arith.constant 0 : index
    %c0_49 = arith.constant 0 : index
    %c0_50 = arith.constant 0 : index
    %150 = vector.load %arg9[%c0_48, %c0_49, %c0_50] : memref<1x64x32xbf16, #tpu.memory_space<vmem>>, vector<1x64x32xbf16>
    %151 = vector.shape_cast %150 : vector<1x64x32xbf16> to vector<64x32xbf16>
    %cst_51 = arith.constant dense<0.000000e+00> : vector<8x32xf32>
    %152 = tpu.matmul %149, %151, %cst_51 {dimension_numbers = #tpu.dot_dimension_numbers<[1], [0], [0], [1], [0, 0, 1, 1], [], []>} : vector<8x64xbf16>, vector<64x32xbf16>, vector<8x32xf32> -> vector<8x32xf32>
    %153 = vector.extract_strided_slice %5 {offsets = [3, 0], sizes = [1, 32], strides = [1, 1]} : vector<6x32xf32> to vector<1x32xf32>
    %154 = vector.broadcast %153 : vector<1x32xf32> to vector<8x32xf32>
    %155 = arith.addf %152, %154 : vector<8x32xf32>
    %156 = arith.addf %127, %155 : vector<8x32xf32>
    %157 = vector.extract_strided_slice %5 {offsets = [4, 0], sizes = [1, 32], strides = [1, 1]} : vector<6x32xf32> to vector<1x32xf32>
    %158 = vector.extract_strided_slice %5 {offsets = [5, 0], sizes = [1, 32], strides = [1, 1]} : vector<6x32xf32> to vector<1x32xf32>
    %cst_52 = arith.constant dense<0.000000e+00> : vector<8xf32>
    %159 = vector.multi_reduction <add>, %156, %cst_52 [1] : vector<8x32xf32> to vector<8xf32>
    %160 = vector.shape_cast %159 : vector<8xf32> to vector<8x1xf32>
    %cst_53 = arith.constant 3.200000e+01 : f32
    %161 = vector.broadcast %cst_53 : f32 to vector<8x1xf32>
    %162 = arith.divf %160, %161 : vector<8x1xf32>
    %163 = vector.broadcast %162 : vector<8x1xf32> to vector<8x32xf32>
    %164 = arith.subf %156, %163 : vector<8x32xf32>
    %165 = arith.mulf %164, %164 : vector<8x32xf32>
    %cst_54 = arith.constant dense<0.000000e+00> : vector<8xf32>
    %166 = vector.multi_reduction <add>, %165, %cst_54 [1] : vector<8x32xf32> to vector<8xf32>
    %167 = vector.shape_cast %166 : vector<8xf32> to vector<8x1xf32>
    %cst_55 = arith.constant 3.200000e+01 : f32
    %168 = vector.broadcast %cst_55 : f32 to vector<8x1xf32>
    %169 = arith.divf %167, %168 : vector<8x1xf32>
    %170 = vector.broadcast %162 : vector<8x1xf32> to vector<8x32xf32>
    %171 = arith.subf %156, %170 : vector<8x32xf32>
    %cst_56 = arith.constant 9.99999974E-6 : f32
    %172 = vector.broadcast %cst_56 : f32 to vector<8x1xf32>
    %173 = arith.addf %169, %172 : vector<8x1xf32>
    %174 = math.rsqrt %173 : vector<8x1xf32>
    %175 = vector.broadcast %174 : vector<8x1xf32> to vector<8x32xf32>
    %176 = arith.mulf %171, %175 : vector<8x32xf32>
    %177 = vector.broadcast %157 : vector<1x32xf32> to vector<8x32xf32>
    %178 = arith.mulf %176, %177 : vector<8x32xf32>
    %179 = vector.broadcast %158 : vector<1x32xf32> to vector<8x32xf32>
    %180 = arith.addf %178, %179 : vector<8x32xf32>
    %c0_57 = arith.constant 0 : index
    %c0_58 = arith.constant 0 : index
    %181 = vector.load %arg16[%c0_57, %c0_58] : memref<8x32xf32, #tpu.memory_space<vmem>>, vector<8x32xf32>
    tpu.vector_store %arg16[%c0_57, %c0_58], %180 {strides = array<i32>} : memref<8x32xf32, #tpu.memory_space<vmem>>, vector<8x32xf32>,
    %c1_i32 = arith.constant 1 : i32
    %182 = arith.cmpi eq, %arg0, %c1_i32 : i32
    %183 = arith.extui %182 : i1 to i32
    %c0_i32_59 = arith.constant 0 : i32
    %184 = arith.cmpi ne, %183, %c0_i32_59 : i32
    scf.if %184 {
      %c0_60 = arith.constant 0 : index
      %c0_61 = arith.constant 0 : index
      %185 = vector.load %arg16[%c0_60, %c0_61] : memref<8x32xf32, #tpu.memory_space<vmem>>, vector<8x32xf32>
      %186 = arith.truncf %185 : vector<8x32xf32> to vector<8x32xbf16>
      %c0_62 = arith.constant 0 : index
      %c0_63 = arith.constant 0 : index
      %187 = vector.load %arg13[%c0_62, %c0_63] : memref<32x128xbf16, #tpu.memory_space<vmem>>, vector<32x128xbf16>
      %cst_64 = arith.constant dense<0.000000e+00> : vector<8x128xf32>
      %188 = tpu.matmul %186, %187, %cst_64 {dimension_numbers = #tpu.dot_dimension_numbers<[1], [0], [0], [1], [0, 0, 1, 1], [], []>} : vector<8x32xbf16>, vector<32x128xbf16>, vector<8x128xf32> -> vector<8x128xf32>
      %c0_65 = arith.constant 0 : index
      %c0_66 = arith.constant 0 : index
      %189 = vector.load %arg14[%c0_65, %c0_66] : memref<1x128xf32, #tpu.memory_space<vmem>>, vector<1x128xf32>
      %190 = vector.broadcast %189 : vector<1x128xf32> to vector<8x128xf32>
      %191 = arith.addf %188, %190 : vector<8x128xf32>
      %192 = tpu.iota {dimensions = array<i32: 1>} : vector<8x128xi32>
      %c16_i32 = arith.constant 16 : i32
      %193 = vector.broadcast %c16_i32 : i32 to vector<8x128xi32>
      %194 = arith.cmpi eq, %192, %193 : vector<8x128xi32>
      %195 = math.tanh %191 : vector<8x128xf32>
      %196 = arith.select %194, %195, %191 : vector<8x128xi1>, vector<8x128xf32>
      %c0_67 = arith.constant 0 : index
      %c0_68 = arith.constant 0 : index
      %197 = vector.load %arg15[%c0_67, %c0_68] : memref<8x128xf32, #tpu.memory_space<vmem>>, vector<8x128xf32>
      tpu.vector_store %arg15[%c0_67, %c0_68], %196 {strides = array<i32>} : memref<8x128xf32, #tpu.memory_space<vmem>>, vector<8x128xf32>,
    } else {
    }
    return
  }
  func.func @transform_0(%arg0: i32) -> (i32, i32) {
    %c0_i32 = arith.constant 0 : i32
    %c0_i32_0 = arith.constant 0 : i32
    %c0_i32_1 = arith.constant 0 : i32
    return %c0_i32, %c0_i32_0 : i32, i32
  }
  func.func @transform_1(%arg0: i32) -> (i32, i32, i32) {
    %c0_i32 = arith.constant 0 : i32
    %c0_i32_0 = arith.constant 0 : i32
    %c0_i32_1 = arith.constant 0 : i32
    %c0_i32_2 = arith.constant 0 : i32
    return %c0_i32, %c0_i32_0, %c0_i32_1 : i32, i32, i32
  }
  func.func @transform_2(%arg0: i32) -> (i32, i32) {
    %c0_i32 = arith.constant 0 : i32
    %c0_i32_0 = arith.constant 0 : i32
    %c0_i32_1 = arith.constant 0 : i32
    return %c0_i32, %c0_i32_0 : i32, i32
  }
  func.func @transform_3(%arg0: i32) -> (i32, i32) {
    %c0_i32 = arith.constant 0 : i32
    %c0_i32_0 = arith.constant 0 : i32
    %c0_i32_1 = arith.constant 0 : i32
    return %c0_i32, %c0_i32_0 : i32, i32
  }
  func.func @transform_4(%arg0: i32) -> (i32, i32) {
    %c0_i32 = arith.constant 0 : i32
    %c0_i32_0 = arith.constant 0 : i32
    %c0_i32_1 = arith.constant 0 : i32
    return %c0_i32, %c0_i32_0 : i32, i32
  }
  func.func @transform_5(%arg0: i32) -> (i32, i32, i32) {
    %c0_i32 = arith.constant 0 : i32
    %c0_i32_0 = arith.constant 0 : i32
    %c0_i32_1 = arith.constant 0 : i32
    return %arg0, %c0_i32, %c0_i32_0 : i32, i32, i32
  }
  func.func @transform_6(%arg0: i32) -> (i32, i32, i32) {
    %c0_i32 = arith.constant 0 : i32
    %c0_i32_0 = arith.constant 0 : i32
    %c0_i32_1 = arith.constant 0 : i32
    return %arg0, %c0_i32, %c0_i32_0 : i32, i32, i32
  }
  func.func @transform_7(%arg0: i32) -> (i32, i32, i32) {
    %c0_i32 = arith.constant 0 : i32
    %c0_i32_0 = arith.constant 0 : i32
    %c0_i32_1 = arith.constant 0 : i32
    return %arg0, %c0_i32, %c0_i32_0 : i32, i32, i32
  }
  func.func @transform_8(%arg0: i32) -> (i32, i32, i32) {
    %c0_i32 = arith.constant 0 : i32
    %c0_i32_0 = arith.constant 0 : i32
    %c0_i32_1 = arith.constant 0 : i32
    return %arg0, %c0_i32, %c0_i32_0 : i32, i32, i32
  }
  func.func @transform_9(%arg0: i32) -> (i32, i32, i32) {
    %c0_i32 = arith.constant 0 : i32
    %c0_i32_0 = arith.constant 0 : i32
    %c0_i32_1 = arith.constant 0 : i32
    return %arg0, %c0_i32, %c0_i32_0 : i32, i32, i32
  }
  func.func @transform_10(%arg0: i32) -> (i32, i32, i32) {
    %c0_i32 = arith.constant 0 : i32
    %c0_i32_0 = arith.constant 0 : i32
    %c0_i32_1 = arith.constant 0 : i32
    return %arg0, %c0_i32, %c0_i32_0 : i32, i32, i32
  }
  func.func @transform_11(%arg0: i32) -> (i32, i32, i32) {
    %c0_i32 = arith.constant 0 : i32
    %c0_i32_0 = arith.constant 0 : i32
    %c0_i32_1 = arith.constant 0 : i32
    return %arg0, %c0_i32, %c0_i32_0 : i32, i32, i32
  }
  func.func @transform_12(%arg0: i32) -> (i32, i32) {
    %c0_i32 = arith.constant 0 : i32
    %c0_i32_0 = arith.constant 0 : i32
    %c0_i32_1 = arith.constant 0 : i32
    return %c0_i32, %c0_i32_0 : i32, i32
  }
  func.func @transform_13(%arg0: i32) -> (i32, i32) {
    %c0_i32 = arith.constant 0 : i32
    %c0_i32_0 = arith.constant 0 : i32
    %c0_i32_1 = arith.constant 0 : i32
    return %c0_i32, %c0_i32_0 : i32, i32
  }
  func.func @transform_14(%arg0: i32) -> (i32, i32) {
    %c0_i32 = arith.constant 0 : i32
    %c0_i32_0 = arith.constant 0 : i32
    %c0_i32_1 = arith.constant 0 : i32
    return %c0_i32, %c0_i32_0 : i32, i32
  }
}

</mosaic_0001>

<llo_original>
// kernel: tpu_custom_call.1
$region0: #{tpu_custom_call.1}
  #allocation0 [shape = 'u32[]', space=smem, size = 0x4, offset = 0x4, fixed_abs, tag = 'smem constant byte address 0x4 - core index']
  #allocation1 [shape = 'u32[72,128]{1,0:T(1,128)}', space=vmem, size = 0x9000, scoped, tag = 'internal scratch']
  #allocation2 [shape = 'f32[8,32]{1,0:T(8,128)}', space=vmem, size = 0x1000, scoped, tag = 'scratch operand']
  %s0 = inlined_call_operand.vmem [shape: bf16[512,36], index: 0, kind: input, shape index: {}]
  %s1 = inlined_call_operand.vmem [shape: f32[8,64,32], index: 1, kind: input, shape index: {}]
  %s2 = inlined_call_operand.vmem [shape: bf16[36,32], index: 2, kind: input, shape index: {}]
  %s3 = inlined_call_operand.vmem [shape: bf16[64,32], index: 3, kind: input, shape index: {}]
  %s4 = inlined_call_operand.vmem [shape: f32[4,32], index: 4, kind: input, shape index: {}]
  %s5 = inlined_call_operand.vmem [shape: bf16[2,32,96], index: 5, kind: input, shape index: {}]
  %s6 = inlined_call_operand.vmem [shape: bf16[2,32,32], index: 6, kind: input, shape index: {}]
  %s7 = inlined_call_operand.vmem [shape: bf16[2,32,64], index: 7, kind: input, shape index: {}]
  %s8 = inlined_call_operand.vmem [shape: bf16[2,64,32], index: 8, kind: input, shape index: {}]
  %s9 = inlined_call_operand.vmem [shape: f32[2,1,96], index: 9, kind: input, shape index: {}]
  %s10 = inlined_call_operand.vmem [shape: f32[2,6,32], index: 10, kind: input, shape index: {}]
  %s11 = inlined_call_operand.vmem [shape: f32[2,1,64], index: 11, kind: input, shape index: {}]
  %s12 = inlined_call_operand.vmem [shape: bf16[32,128], index: 12, kind: input, shape index: {}]
  %s13 = inlined_call_operand.vmem [shape: f32[1,128], index: 13, kind: input, shape index: {}]
  %s14 = inlined_call_operand.hbm [shape: f32[8,128], index: 14, kind: output, shape index: {}]
  %s15 = sld [smem:[#allocation0]]
  $region97: #{tpu_custom_call.1} parent=0
    _
  %s17 = ssub.s32 1, %s15
  %s18 = scalar_select 0, %s17, %s15
  $region1: #{tpu_custom_call.1} parent=0
    #allocation3 [shape = 'u8[4096]{0}', space=vmem, size = 0x1000, scoped, tag = 'output window, operand 0, single buffered']
    #allocation4 [shape = 's32[2]{0}', space=sflag, size = 0x8, scoped, tag = 'scoped memory for tpu_custom_call.1']
    %19 = vsyncpa [#allocation4], 0
    loop: start=0, step=1, limit=4
    $region2: #{tpu_custom_call.1} parent=1 // loop_pre_header
      _
    $region3: #{tpu_custom_call.1} parent=1 // loop_header
      %s21 = sphi 0, %s25
      %p22 = scmp.ge.s32.totalorder %s21, 4
      %s29 = sphi 0, %s29
      %s31 = sphi 0, %s29
      %s32 = sphi 0, %s31
      %s46 = sphi 0, %s32
      %s50 = sphi 0, %s50
      %s52 = sphi 0, %s50
      %s53 = sphi 0, %s52
      %s67 = sphi 0, %s53
      %s71 = sphi 0, %s71
      %s73 = sphi 0, %s71
      %s74 = sphi 0, %s73
      %s88 = sphi 0, %s74
      %s92 = sphi 0, %s92
      %s94 = sphi 0, %s92
      %s95 = sphi 0, %s94
      %s109 = sphi 0, %s95
      %s113 = sphi 0, %s113
      %s115 = sphi 0, %s113
      %s116 = sphi 0, %s115
      %s130 = sphi 0, %s116
      %s136 = sphi 0, %s138
      %s139 = sphi 0, %s136
      %s140 = sphi 0, %s139
      %s156 = sphi 0, %s140
      %s162 = sphi 0, %s164
      %s165 = sphi 0, %s162
      %s166 = sphi 0, %s165
      %s182 = sphi 0, %s166
      %s188 = sphi 0, %s190
      %s191 = sphi 0, %s188
      %s192 = sphi 0, %s191
      %s208 = sphi 0, %s192
      %s214 = sphi 0, %s216
      %s217 = sphi 0, %s214
      %s218 = sphi 0, %s217
      %s234 = sphi 0, %s218
      %s240 = sphi 0, %s242
      %s243 = sphi 0, %s240
      %s244 = sphi 0, %s243
      %s260 = sphi 0, %s244
      %s266 = sphi 0, %s268
      %s269 = sphi 0, %s266
      %s270 = sphi 0, %s269
      %s286 = sphi 0, %s270
      %s292 = sphi 0, %s294
      %s295 = sphi 0, %s292
      %s296 = sphi 0, %s295
      %s312 = sphi 0, %s296
      %s316 = sphi 0, %s316
      %s318 = sphi 0, %s316
      %s319 = sphi 0, %s318
      %s333 = sphi 0, %s319
      %s337 = sphi 0, %s337
      %s339 = sphi 0, %s337
      %s340 = sphi 0, %s339
      %s354 = sphi 0, %s340
      %s358 = sphi 0, %s358
      %s360 = sphi 0, %s358
      %s361 = sphi 0, %s360
      %s375 = sphi 0, %s361
    $region4: #{tpu_custom_call.1} parent=1 // loop_header_branch
      %24 = sbr.rel (%p22) target = $region8
    $region5: #{tpu_custom_call.1} parent=1 // loop_body
      %s26 = ssub.s32 %s21, 1
      %s27 = ssub.s32 %s21, 2
      %s28 = sadd.s32 %s21, 1
      %s30 = sadd.s32 %s29, 1
      %p33 = scmp.eq.s32.totalorder %s21, 1
      %p34 = scmp.ne.s32.totalorder %s29, %s31
      %p35 = scmp.eq.s32.totalorder %s21, 0
      %p36 = por %p34, %p35
      %p37 = scmp.ne.s32.totalorder %s29, %s31
      %p38 = scmp.eq.s32.totalorder %s26, 1
      %p39 = por %p37, %p38
      %p40 = scmp.ne.s32.totalorder %s31, %s32
      %p41 = scmp.eq.s32.totalorder %s26, 0
      %p42 = por %p40, %p41
      %p43 = scmp.ne.s32.totalorder %s31, %s32
      %p44 = scmp.eq.s32.totalorder %s27, 1
      %p45 = por %p43, %p44
      %p47 = scmp.ne.s32.totalorder %s32, %s46
      %p48 = scmp.eq.s32.totalorder %s27, 0
      %p49 = por %p47, %p48
      %s51 = sadd.s32 %s50, 1
      %p54 = scmp.eq.s32.totalorder %s21, 1
      %p55 = scmp.ne.s32.totalorder %s50, %s52
      %p56 = scmp.eq.s32.totalorder %s21, 0
      %p57 = por %p55, %p56
      %p58 = scmp.ne.s32.totalorder %s50, %s52
      %p59 = scmp.eq.s32.totalorder %s26, 1
      %p60 = por %p58, %p59
      %p61 = scmp.ne.s32.totalorder %s52, %s53
      %p62 = scmp.eq.s32.totalorder %s26, 0
      %p63 = por %p61, %p62
      %p64 = scmp.ne.s32.totalorder %s52, %s53
      %p65 = scmp.eq.s32.totalorder %s27, 1
      %p66 = por %p64, %p65
      %p68 = scmp.ne.s32.totalorder %s53, %s67
      %p69 = scmp.eq.s32.totalorder %s27, 0
      %p70 = por %p68, %p69
      %s72 = sadd.s32 %s71, 1
      %p75 = scmp.eq.s32.totalorder %s21, 1
      %p76 = scmp.ne.s32.totalorder %s71, %s73
      %p77 = scmp.eq.s32.totalorder %s21, 0
      %p78 = por %p76, %p77
      %p79 = scmp.ne.s32.totalorder %s71, %s73
      %p80 = scmp.eq.s32.totalorder %s26, 1
      %p81 = por %p79, %p80
      %p82 = scmp.ne.s32.totalorder %s73, %s74
      %p83 = scmp.eq.s32.totalorder %s26, 0
      %p84 = por %p82, %p83
      %p85 = scmp.ne.s32.totalorder %s73, %s74
      %p86 = scmp.eq.s32.totalorder %s27, 1
      %p87 = por %p85, %p86
      %p89 = scmp.ne.s32.totalorder %s74, %s88
      %p90 = scmp.eq.s32.totalorder %s27, 0
      %p91 = por %p89, %p90
      %s93 = sadd.s32 %s92, 1
      %p96 = scmp.eq.s32.totalorder %s21, 1
      %p97 = scmp.ne.s32.totalorder %s92, %s94
      %p98 = scmp.eq.s32.totalorder %s21, 0
      %p99 = por %p97, %p98
      %p100 = scmp.ne.s32.totalorder %s92, %s94
      %p101 = scmp.eq.s32.totalorder %s26, 1
      %p102 = por %p100, %p101
      %p103 = scmp.ne.s32.totalorder %s94, %s95
      %p104 = scmp.eq.s32.totalorder %s26, 0
      %p105 = por %p103, %p104
      %p106 = scmp.ne.s32.totalorder %s94, %s95
      %p107 = scmp.eq.s32.totalorder %s27, 1
      %p108 = por %p106, %p107
      %p110 = scmp.ne.s32.totalorder %s95, %s109
      %p111 = scmp.eq.s32.totalorder %s27, 0
      %p112 = por %p110, %p111
      %s114 = sadd.s32 %s113, 1
      %p117 = scmp.eq.s32.totalorder %s21, 1
      %p118 = scmp.ne.s32.totalorder %s113, %s115
      %p119 = scmp.eq.s32.totalorder %s21, 0
      %p120 = por %p118, %p119
      %p121 = scmp.ne.s32.totalorder %s113, %s115
      %p122 = scmp.eq.s32.totalorder %s26, 1
      %p123 = por %p121, %p122
      %p124 = scmp.ne.s32.totalorder %s115, %s116
      %p125 = scmp.eq.s32.totalorder %s26, 0
      %p126 = por %p124, %p125
      %p127 = scmp.ne.s32.totalorder %s115, %s116
      %p128 = scmp.eq.s32.totalorder %s27, 1
      %p129 = por %p127, %p128
      %p131 = scmp.ne.s32.totalorder %s116, %s130
      %p132 = scmp.eq.s32.totalorder %s27, 0
      %p133 = por %p131, %p132
      %s134 = ssub.s32 %s21, %s28
      %p135 = scmp.eq.s32.totalorder %s134, 0
      %s137 = sadd.s32 %s136, 1
      %s138 = scalar_select %p135, %s136, %s137
      %p141 = pneg %p135
      %p142 = scmp.eq.s32.totalorder %s21, 1
      %p143 = por %p141, %p142
      %p144 = scmp.ne.s32.totalorder %s136, %s139
      %p145 = scmp.eq.s32.totalorder %s21, 0
      %p146 = por %p144, %p145
      %p147 = scmp.ne.s32.totalorder %s136, %s139
      %p148 = scmp.eq.s32.totalorder %s26, 1
      %p149 = por %p147, %p148
      %p150 = scmp.ne.s32.totalorder %s139, %s140
      %p151 = scmp.eq.s32.totalorder %s26, 0
      %p152 = por %p150, %p151
      %p153 = scmp.ne.s32.totalorder %s139, %s140
      %p154 = scmp.eq.s32.totalorder %s27, 1
      %p155 = por %p153, %p154
      %p157 = scmp.ne.s32.totalorder %s140, %s156
      %p158 = scmp.eq.s32.totalorder %s27, 0
      %p159 = por %p157, %p158
      %s160 = ssub.s32 %s21, %s28
      %p161 = scmp.eq.s32.totalorder %s160, 0
      %s163 = sadd.s32 %s162, 1
      %s164 = scalar_select %p161, %s162, %s163
      %p167 = pneg %p161
      %p168 = scmp.eq.s32.totalorder %s21, 1
      %p169 = por %p167, %p168
      %p170 = scmp.ne.s32.totalorder %s162, %s165
      %p171 = scmp.eq.s32.totalorder %s21, 0
      %p172 = por %p170, %p171
      %p173 = scmp.ne.s32.totalorder %s162, %s165
      %p174 = scmp.eq.s32.totalorder %s26, 1
      %p175 = por %p173, %p174
      %p176 = scmp.ne.s32.totalorder %s165, %s166
      %p177 = scmp.eq.s32.totalorder %s26, 0
      %p178 = por %p176, %p177
      %p179 = scmp.ne.s32.totalorder %s165, %s166
      %p180 = scmp.eq.s32.totalorder %s27, 1
      %p181 = por %p179, %p180
      %p183 = scmp.ne.s32.totalorder %s166, %s182
      %p184 = scmp.eq.s32.totalorder %s27, 0
      %p185 = por %p183, %p184
      %s186 = ssub.s32 %s21, %s28
      %p187 = scmp.eq.s32.totalorder %s186, 0
      %s189 = sadd.s32 %s188, 1
      %s190 = scalar_select %p187, %s188, %s189
      %p193 = pneg %p187
      %p194 = scmp.eq.s32.totalorder %s21, 1
      %p195 = por %p193, %p194
      %p196 = scmp.ne.s32.totalorder %s188, %s191
      %p197 = scmp.eq.s32.totalorder %s21, 0
      %p198 = por %p196, %p197
      %p199 = scmp.ne.s32.totalorder %s188, %s191
      %p200 = scmp.eq.s32.totalorder %s26, 1
      %p201 = por %p199, %p200
      %p202 = scmp.ne.s32.totalorder %s191, %s192
      %p203 = scmp.eq.s32.totalorder %s26, 0
      %p204 = por %p202, %p203
      %p205 = scmp.ne.s32.totalorder %s191, %s192
      %p206 = scmp.eq.s32.totalorder %s27, 1
      %p207 = por %p205, %p206
      %p209 = scmp.ne.s32.totalorder %s192, %s208
      %p210 = scmp.eq.s32.totalorder %s27, 0
      %p211 = por %p209, %p210
      %s212 = ssub.s32 %s21, %s28
      %p213 = scmp.eq.s32.totalorder %s212, 0
      %s215 = sadd.s32 %s214, 1
      %s216 = scalar_select %p213, %s214, %s215
      %p219 = pneg %p213
      %p220 = scmp.eq.s32.totalorder %s21, 1
      %p221 = por %p219, %p220
      %p222 = scmp.ne.s32.totalorder %s214, %s217
      %p223 = scmp.eq.s32.totalorder %s21, 0
      %p224 = por %p222, %p223
      %p225 = scmp.ne.s32.totalorder %s214, %s217
      %p226 = scmp.eq.s32.totalorder %s26, 1
      %p227 = por %p225, %p226
      %p228 = scmp.ne.s32.totalorder %s217, %s218
      %p229 = scmp.eq.s32.totalorder %s26, 0
      %p230 = por %p228, %p229
      %p231 = scmp.ne.s32.totalorder %s217, %s218
      %p232 = scmp.eq.s32.totalorder %s27, 1
      %p233 = por %p231, %p232
      %p235 = scmp.ne.s32.totalorder %s218, %s234
      %p236 = scmp.eq.s32.totalorder %s27, 0
      %p237 = por %p235, %p236
      %s238 = ssub.s32 %s21, %s28
      %p239 = scmp.eq.s32.totalorder %s238, 0
      %s241 = sadd.s32 %s240, 1
      %s242 = scalar_select %p239, %s240, %s241
      %p245 = pneg %p239
      %p246 = scmp.eq.s32.totalorder %s21, 1
      %p247 = por %p245, %p246
      %p248 = scmp.ne.s32.totalorder %s240, %s243
      %p249 = scmp.eq.s32.totalorder %s21, 0
      %p250 = por %p248, %p249
      %p251 = scmp.ne.s32.totalorder %s240, %s243
      %p252 = scmp.eq.s32.totalorder %s26, 1
      %p253 = por %p251, %p252
      %p254 = scmp.ne.s32.totalorder %s243, %s244
      %p255 = scmp.eq.s32.totalorder %s26, 0
      %p256 = por %p254, %p255
      %p257 = scmp.ne.s32.totalorder %s243, %s244
      %p258 = scmp.eq.s32.totalorder %s27, 1
      %p259 = por %p257, %p258
      %p261 = scmp.ne.s32.totalorder %s244, %s260
      %p262 = scmp.eq.s32.totalorder %s27, 0
      %p263 = por %p261, %p262
      %s264 = ssub.s32 %s21, %s28
      %p265 = scmp.eq.s32.totalorder %s264, 0
      %s267 = sadd.s32 %s266, 1
      %s268 = scalar_select %p265, %s266, %s267
      %p271 = pneg %p265
      %p272 = scmp.eq.s32.totalorder %s21, 1
      %p273 = por %p271, %p272
      %p274 = scmp.ne.s32.totalorder %s266, %s269
      %p275 = scmp.eq.s32.totalorder %s21, 0
      %p276 = por %p274, %p275
      %p277 = scmp.ne.s32.totalorder %s266, %s269
      %p278 = scmp.eq.s32.totalorder %s26, 1
      %p279 = por %p277, %p278
      %p280 = scmp.ne.s32.totalorder %s269, %s270
      %p281 = scmp.eq.s32.totalorder %s26, 0
      %p282 = por %p280, %p281
      %p283 = scmp.ne.s32.totalorder %s269, %s270
      %p284 = scmp.eq.s32.totalorder %s27, 1
      %p285 = por %p283, %p284
      %p287 = scmp.ne.s32.totalorder %s270, %s286
      %p288 = scmp.eq.s32.totalorder %s27, 0
      %p289 = por %p287, %p288
      %s290 = ssub.s32 %s21, %s28
      %p291 = scmp.eq.s32.totalorder %s290, 0
      %s293 = sadd.s32 %s292, 1
      %s294 = scalar_select %p291, %s292, %s293
      %p297 = pneg %p291
      %p298 = scmp.eq.s32.totalorder %s21, 1
      %p299 = por %p297, %p298
      %p300 = scmp.ne.s32.totalorder %s292, %s295
      %p301 = scmp.eq.s32.totalorder %s21, 0
      %p302 = por %p300, %p301
      %p303 = scmp.ne.s32.totalorder %s292, %s295
      %p304 = scmp.eq.s32.totalorder %s26, 1
      %p305 = por %p303, %p304
      %p306 = scmp.ne.s32.totalorder %s295, %s296
      %p307 = scmp.eq.s32.totalorder %s26, 0
      %p308 = por %p306, %p307
      %p309 = scmp.ne.s32.totalorder %s295, %s296
      %p310 = scmp.eq.s32.totalorder %s27, 1
      %p311 = por %p309, %p310
      %p313 = scmp.ne.s32.totalorder %s296, %s312
      %p314 = scmp.eq.s32.totalorder %s27, 0
      %p315 = por %p313, %p314
      %s317 = sadd.s32 %s316, 1
      %p320 = scmp.eq.s32.totalorder %s21, 1
      %p321 = scmp.ne.s32.totalorder %s316, %s318
      %p322 = scmp.eq.s32.totalorder %s21, 0
      %p323 = por %p321, %p322
      %p324 = scmp.ne.s32.totalorder %s316, %s318
      %p325 = scmp.eq.s32.totalorder %s26, 1
      %p326 = por %p324, %p325
      %p327 = scmp.ne.s32.totalorder %s318, %s319
      %p328 = scmp.eq.s32.totalorder %s26, 0
      %p329 = por %p327, %p328
      %p330 = scmp.ne.s32.totalorder %s318, %s319
      %p331 = scmp.eq.s32.totalorder %s27, 1
      %p332 = por %p330, %p331
      %p334 = scmp.ne.s32.totalorder %s319, %s333
      %p335 = scmp.eq.s32.totalorder %s27, 0
      %p336 = por %p334, %p335
      %s338 = sadd.s32 %s337, 1
      %p341 = scmp.eq.s32.totalorder %s21, 1
      %p342 = scmp.ne.s32.totalorder %s337, %s339
      %p343 = scmp.eq.s32.totalorder %s21, 0
      %p344 = por %p342, %p343
      %p345 = scmp.ne.s32.totalorder %s337, %s339
      %p346 = scmp.eq.s32.totalorder %s26, 1
      %p347 = por %p345, %p346
      %p348 = scmp.ne.s32.totalorder %s339, %s340
      %p349 = scmp.eq.s32.totalorder %s26, 0
      %p350 = por %p348, %p349
      %p351 = scmp.ne.s32.totalorder %s339, %s340
      %p352 = scmp.eq.s32.totalorder %s27, 1
      %p353 = por %p351, %p352
      %p355 = scmp.ne.s32.totalorder %s340, %s354
      %p356 = scmp.eq.s32.totalorder %s27, 0
      %p357 = por %p355, %p356
      %s359 = sadd.s32 %s358, 1
      %p362 = scmp.eq.s32.totalorder %s21, 1
      %p363 = scmp.ne.s32.totalorder %s358, %s360
      %p364 = scmp.eq.s32.totalorder %s21, 0
      %p365 = por %p363, %p364
      %p366 = scmp.ne.s32.totalorder %s358, %s360
      %p367 = scmp.eq.s32.totalorder %s26, 1
      %p368 = por %p366, %p367
      %p369 = scmp.ne.s32.totalorder %s360, %s361
      %p370 = scmp.eq.s32.totalorder %s26, 0
      %p371 = por %p369, %p370
      %p372 = scmp.ne.s32.totalorder %s360, %s361
      %p373 = scmp.eq.s32.totalorder %s27, 1
      %p374 = por %p372, %p373
      %p376 = scmp.ne.s32.totalorder %s361, %s375
      %p377 = scmp.eq.s32.totalorder %s27, 0
      %p378 = por %p376, %p377
      %p379 = scmp.le.s32.totalorder 1, %s21
      %p380 = scmp.lt.s32.totalorder %s21, 3
      %p381 = pnand %p379, %p380
      %p382 = pneg %p381
      // Predicated region
      $region9: #{tpu_custom_call.1} parent=5 // pred_check
        _
      $region10: #{tpu_custom_call.1} parent=5 // pred_check_branch
        %384 = sbr.rel (%p381) target = $region12
      $region11: #{tpu_custom_call.1} parent=5 // pred_region
        %s385 = ssub.s32 %s21, 1
        // Predicated region
        $region13: #{tpu_custom_call.1} parent=11 // pred_check
          %p386 = pneg %p42
        $region14: #{tpu_custom_call.1} parent=11 // pred_check_branch
          %388 = sbr.rel (%p386) target = $region16
        $region15: #{tpu_custom_call.1} parent=11 // pred_region
          _
        $region16: #{tpu_custom_call.1} parent=11 // pred_fallthru
          _
        // Predicated region
        $region17: #{tpu_custom_call.1} parent=11 // pred_check
          %p389 = pneg %p63
        $region18: #{tpu_custom_call.1} parent=11 // pred_check_branch
          %391 = sbr.rel (%p389) target = $region20
        $region19: #{tpu_custom_call.1} parent=11 // pred_region
          _
        $region20: #{tpu_custom_call.1} parent=11 // pred_fallthru
          _
        // Predicated region
        $region21: #{tpu_custom_call.1} parent=11 // pred_check
          %p392 = pneg %p84
        $region22: #{tpu_custom_call.1} parent=11 // pred_check_branch
          %394 = sbr.rel (%p392) target = $region24
        $region23: #{tpu_custom_call.1} parent=11 // pred_region
          _
        $region24: #{tpu_custom_call.1} parent=11 // pred_fallthru
          _
        // Predicated region
        $region25: #{tpu_custom_call.1} parent=11 // pred_check
          %p395 = pneg %p105
        $region26: #{tpu_custom_call.1} parent=11 // pred_check_branch
          %397 = sbr.rel (%p395) target = $region28
        $region27: #{tpu_custom_call.1} parent=11 // pred_region
          _
        $region28: #{tpu_custom_call.1} parent=11 // pred_fallthru
          _
        // Predicated region
        $region29: #{tpu_custom_call.1} parent=11 // pred_check
          %p398 = pneg %p126
        $region30: #{tpu_custom_call.1} parent=11 // pred_check_branch
          %400 = sbr.rel (%p398) target = $region32
        $region31: #{tpu_custom_call.1} parent=11 // pred_region
          _
        $region32: #{tpu_custom_call.1} parent=11 // pred_fallthru
          _
        // Predicated region
        $region33: #{tpu_custom_call.1} parent=11 // pred_check
          %p401 = pneg %p329
        $region34: #{tpu_custom_call.1} parent=11 // pred_check_branch
          %403 = sbr.rel (%p401) target = $region36
        $region35: #{tpu_custom_call.1} parent=11 // pred_region
          _
        $region36: #{tpu_custom_call.1} parent=11 // pred_fallthru
          _
        // Predicated region
        $region37: #{tpu_custom_call.1} parent=11 // pred_check
          %p404 = pneg %p350
        $region38: #{tpu_custom_call.1} parent=11 // pred_check_branch
          %406 = sbr.rel (%p404) target = $region40
        $region39: #{tpu_custom_call.1} parent=11 // pred_region
          _
        $region40: #{tpu_custom_call.1} parent=11 // pred_fallthru
          _
      $region12: #{tpu_custom_call.1} parent=5 // pred_fallthru
        _
      %p407 = scmp.lt.s32.totalorder %s21, 2
      // Predicated region
      $region41: #{tpu_custom_call.1} parent=5 // pred_check
        %p408 = pneg %p407
      $region42: #{tpu_custom_call.1} parent=5 // pred_check_branch
        %410 = sbr.rel (%p408) target = $region44
      $region43: #{tpu_custom_call.1} parent=5 // pred_region
        // Predicated region
        $region45: #{tpu_custom_call.1} parent=43 // pred_check
          %p411 = pneg %p146
        $region46: #{tpu_custom_call.1} parent=43 // pred_check_branch
          %413 = sbr.rel (%p411) target = $region48
        $region47: #{tpu_custom_call.1} parent=43 // pred_region
          %p414 = scmp.lt.s32.totalorder %s21, 1
          %s415 = scalar_select %p414, %s21, 1
          %s416 = smul.addr %s415, 4
          %s417 = smul.addr %s416, 4
          %s418 = scalar_lea.vmem %s5, %s417
        $region48: #{tpu_custom_call.1} parent=43 // pred_fallthru
          _
        // Predicated region
        $region49: #{tpu_custom_call.1} parent=43 // pred_check
          %p419 = pneg %p172
        $region50: #{tpu_custom_call.1} parent=43 // pred_check_branch
          %421 = sbr.rel (%p419) target = $region52
        $region51: #{tpu_custom_call.1} parent=43 // pred_region
          %p422 = scmp.lt.s32.totalorder %s21, 1
          %s423 = scalar_select %p422, %s21, 1
          %s424 = smul.addr %s423, 4
          %s425 = smul.addr %s424, 4
          %s426 = scalar_lea.vmem %s6, %s425
        $region52: #{tpu_custom_call.1} parent=43 // pred_fallthru
          _
        // Predicated region
        $region53: #{tpu_custom_call.1} parent=43 // pred_check
          %p427 = pneg %p198
        $region54: #{tpu_custom_call.1} parent=43 // pred_check_branch
          %429 = sbr.rel (%p427) target = $region56
        $region55: #{tpu_custom_call.1} parent=43 // pred_region
          %p430 = scmp.lt.s32.totalorder %s21, 1
          %s431 = scalar_select %p430, %s21, 1
          %s432 = smul.addr %s431, 4
          %s433 = smul.addr %s432, 4
          %s434 = scalar_lea.vmem %s7, %s433
        $region56: #{tpu_custom_call.1} parent=43 // pred_fallthru
          _
        // Predicated region
        $region57: #{tpu_custom_call.1} parent=43 // pred_check
          %p435 = pneg %p224
        $region58: #{tpu_custom_call.1} parent=43 // pred_check_branch
          %437 = sbr.rel (%p435) target = $region60
        $region59: #{tpu_custom_call.1} parent=43 // pred_region
          %p438 = scmp.lt.s32.totalorder %s21, 1
          %s439 = scalar_select %p438, %s21, 1
          %s440 = smul.addr %s439, 8
          %s441 = smul.addr %s440, 4
          %s442 = scalar_lea.vmem %s8, %s441
        $region60: #{tpu_custom_call.1} parent=43 // pred_fallthru
          _
        // Predicated region
        $region61: #{tpu_custom_call.1} parent=43 // pred_check
          %p443 = pneg %p250
        $region62: #{tpu_custom_call.1} parent=43 // pred_check_branch
          %445 = sbr.rel (%p443) target = $region64
        $region63: #{tpu_custom_call.1} parent=43 // pred_region
          %p446 = scmp.lt.s32.totalorder %s21, 1
          %s447 = scalar_select %p446, %s21, 1
          %s448 = scalar_lea.vmem %s9, %s447
        $region64: #{tpu_custom_call.1} parent=43 // pred_fallthru
          _
        // Predicated region
        $region65: #{tpu_custom_call.1} parent=43 // pred_check
          %p449 = pneg %p276
        $region66: #{tpu_custom_call.1} parent=43 // pred_check_branch
          %451 = sbr.rel (%p449) target = $region68
        $region67: #{tpu_custom_call.1} parent=43 // pred_region
          %p452 = scmp.lt.s32.totalorder %s21, 1
          %s453 = scalar_select %p452, %s21, 1
          %s454 = smul.addr %s453, 8
          %s455 = scalar_lea.vmem %s10, %s454
        $region68: #{tpu_custom_call.1} parent=43 // pred_fallthru
          _
        // Predicated region
        $region69: #{tpu_custom_call.1} parent=43 // pred_check
          %p456 = pneg %p302
        $region70: #{tpu_custom_call.1} parent=43 // pred_check_branch
          %458 = sbr.rel (%p456) target = $region72
        $region71: #{tpu_custom_call.1} parent=43 // pred_region
          %p459 = scmp.lt.s32.totalorder %s21, 1
          %s460 = scalar_select %p459, %s21, 1
          %s461 = scalar_lea.vmem %s11, %s460
        $region72: #{tpu_custom_call.1} parent=43 // pred_fallthru
          _
      $region44: #{tpu_custom_call.1} parent=5 // pred_fallthru
        _
      %p462 = scmp.le.s32.totalorder 1, %s21
      %p463 = scmp.lt.s32.totalorder %s21, 3
      %p464 = pnand %p462, %p463
      %p465 = pneg %p464
      // Predicated region
      $region73: #{tpu_custom_call.1} parent=5 // pred_check
        _
      $region74: #{tpu_custom_call.1} parent=5 // pred_check_branch
        %467 = sbr.rel (%p464) target = $region76
      $region75: #{tpu_custom_call.1} parent=5 // pred_region
        %s468 = ssub.s32 %s21, 1
        %p469 = pneg %p42
        %p470 = pneg %p39
        %p471 = pneg %p63
        %p472 = pneg %p60
        %p473 = pneg %p84
        %p474 = pneg %p81
        %p475 = pneg %p105
        %p476 = pneg %p102
        %p477 = pneg %p126
        %p478 = pneg %p123
        %p479 = scmp.lt.s32.totalorder %s26, 1
        %s480 = scalar_select %p479, %s26, 1
        %s481 = smul.addr %s480, 4
        %s482 = smul.addr %s481, 4
        %s483 = scalar_lea.vmem %s5, %s482
        %p484 = pneg %p152
        %p485 = pneg %p149
        %p486 = scmp.lt.s32.totalorder %s26, 1
        %s487 = scalar_select %p486, %s26, 1
        %s488 = smul.addr %s487, 4
        %s489 = smul.addr %s488, 4
        %s490 = scalar_lea.vmem %s6, %s489
        %p491 = pneg %p178
        %p492 = pneg %p175
        %p493 = scmp.lt.s32.totalorder %s26, 1
        %s494 = scalar_select %p493, %s26, 1
        %s495 = smul.addr %s494, 4
        %s496 = smul.addr %s495, 4
        %s497 = scalar_lea.vmem %s7, %s496
        %p498 = pneg %p204
        %p499 = pneg %p201
        %p500 = scmp.lt.s32.totalorder %s26, 1
        %s501 = scalar_select %p500, %s26, 1
        %s502 = smul.addr %s501, 8
        %s503 = smul.addr %s502, 4
        %s504 = scalar_lea.vmem %s8, %s503
        %p505 = pneg %p230
        %p506 = pneg %p227
        %p507 = scmp.lt.s32.totalorder %s26, 1
        %s508 = scalar_select %p507, %s26, 1
        %s509 = scalar_lea.vmem %s9, %s508
        %p510 = pneg %p256
        %p511 = pneg %p253
        %p512 = scmp.lt.s32.totalorder %s26, 1
        %s513 = scalar_select %p512, %s26, 1
        %s514 = smul.addr %s513, 8
        %s515 = scalar_lea.vmem %s10, %s514
        %p516 = pneg %p282
        %p517 = pneg %p279
        %p518 = scmp.lt.s32.totalorder %s26, 1
        %s519 = scalar_select %p518, %s26, 1
        %s520 = scalar_lea.vmem %s11, %s519
        %p521 = pneg %p308
        %p522 = pneg %p305
        %p523 = pneg %p329
        %p524 = pneg %p326
        %p525 = pneg %p350
        %p526 = pneg %p347
        %p527 = pneg %p371
        %p528 = pneg %p368
        %p529 = scmp.lt.s32.totalorder %s26, 1
        %s530 = scalar_select %p529, %s26, 1
        %s531 = smul.addr %s530, 4
        %s532 = smul.addr %s531, 4
        %s533 = scalar_lea.vmem %s5, %s532
        %p534 = scmp.lt.s32.totalorder %s26, 1
        %s535 = scalar_select %p534, %s26, 1
        %s536 = smul.addr %s535, 4
        %s537 = smul.addr %s536, 4
        %s538 = scalar_lea.vmem %s6, %s537
        %p539 = scmp.lt.s32.totalorder %s26, 1
        %s540 = scalar_select %p539, %s26, 1
        %s541 = smul.addr %s540, 4
        %s542 = smul.addr %s541, 4
        %s543 = scalar_lea.vmem %s7, %s542
        %p544 = scmp.lt.s32.totalorder %s26, 1
        %s545 = scalar_select %p544, %s26, 1
        %s546 = smul.addr %s545, 8
        %s547 = smul.addr %s546, 4
        %s548 = scalar_lea.vmem %s8, %s547
        %p549 = scmp.lt.s32.totalorder %s26, 1
        %s550 = scalar_select %p549, %s26, 1
        %s551 = scalar_lea.vmem %s9, %s550
        %p552 = scmp.lt.s32.totalorder %s26, 1
        %s553 = scalar_select %p552, %s26, 1
        %s554 = smul.addr %s553, 8
        %s555 = scalar_lea.vmem %s10, %s554
        %p556 = scmp.lt.s32.totalorder %s26, 1
        %s557 = scalar_select %p556, %s26, 1
        %s558 = scalar_lea.vmem %s11, %s557
        %p560 = scmp.eq.s32.totalorder %s26, 0
        // Predicated region
        $region77: #{tpu_custom_call.1} parent=75 // pred_check
          %p561 = pneg %p560
        $region78: #{tpu_custom_call.1} parent=75 // pred_check_branch
          %563 = sbr.rel (%p561) target = $region80
        $region79: #{tpu_custom_call.1} parent=75 // pred_region
          %v564 = vld [vmem:[%s0] sm:$0xf]
          %v565 = vld [vmem:[%s0 + $0x4] sm:$0xf]
          %v566 = vld [vmem:[%s0 + $0x8] sm:$0xf]
          %v567 = vld [vmem:[%s0 + $0xc] sm:$0xf]
          %v568 = vld [vmem:[%s0 + $0x10] sm:$0xf]
          %v569 = vld [vmem:[%s0 + $0x14] sm:$0xf]
          %v570 = vld [vmem:[%s0 + $0x18] sm:$0xf]
          %v571 = vld [vmem:[%s0 + $0x1c] sm:$0xf]
          %v572 = vld [vmem:[%s0 + $0x20] sm:$0xf]
          %v573 = vld [vmem:[%s0 + $0x24] sm:$0xf]
          %v574 = vld [vmem:[%s0 + $0x28] sm:$0xf]
          %v575 = vld [vmem:[%s0 + $0x2c] sm:$0xf]
          %v576 = vld [vmem:[%s0 + $0x30] sm:$0xf]
          %v577 = vld [vmem:[%s0 + $0x34] sm:$0xf]
          %v578 = vld [vmem:[%s0 + $0x38] sm:$0xf]
          %v579 = vld [vmem:[%s0 + $0x3c] sm:$0xf]
          %v580 = vld [vmem:[%s0 + $0x40] sm:$0xf]
          %v581 = vld [vmem:[%s0 + $0x44] sm:$0xf]
          %v582 = vld [vmem:[%s0 + $0x48] sm:$0xf]
          %v583 = vld [vmem:[%s0 + $0x4c] sm:$0xf]
          %v584 = vld [vmem:[%s0 + $0x50] sm:$0xf]
          %v585 = vld [vmem:[%s0 + $0x54] sm:$0xf]
          %v586 = vld [vmem:[%s0 + $0x58] sm:$0xf]
          %v587 = vld [vmem:[%s0 + $0x5c] sm:$0xf]
          %v588 = vld [vmem:[%s0 + $0x60] sm:$0xf]
          %v589 = vld [vmem:[%s0 + $0x64] sm:$0xf]
          %v590 = vld [vmem:[%s0 + $0x68] sm:$0xf]
          %v591 = vld [vmem:[%s0 + $0x6c] sm:$0xf]
          %v592 = vld [vmem:[%s0 + $0x70] sm:$0xf]
          %v593 = vld [vmem:[%s0 + $0x74] sm:$0xf]
          %v594 = vld [vmem:[%s0 + $0x78] sm:$0xf]
          %v595 = vld [vmem:[%s0 + $0x7c] sm:$0xf]
          %v596 = vld [vmem:[%s0 + $0x80] sm:$0xf]
          %v597 = vld [vmem:[%s0 + $0x84] sm:$0xf]
          %v598 = vld [vmem:[%s0 + $0x88] sm:$0xf]
          %v599 = vld [vmem:[%s0 + $0x8c] sm:$0xf]
          %v600 = vld [vmem:[%s0 + $0x90] sm:$0xf]
          %v601 = vld [vmem:[%s0 + $0x94] sm:$0xf]
          %v602 = vld [vmem:[%s0 + $0x98] sm:$0xf]
          %v603 = vld [vmem:[%s0 + $0x9c] sm:$0xf]
          %v604 = vld [vmem:[%s0 + $0xa0] sm:$0xf]
          %v605 = vld [vmem:[%s0 + $0xa4] sm:$0xf]
          %v606 = vld [vmem:[%s0 + $0xa8] sm:$0xf]
          %v607 = vld [vmem:[%s0 + $0xac] sm:$0xf]
          %v608 = vld [vmem:[%s0 + $0xb0] sm:$0xf]
          %v609 = vld [vmem:[%s0 + $0xb4] sm:$0xf]
          %v610 = vld [vmem:[%s0 + $0xb8] sm:$0xf]
          %v611 = vld [vmem:[%s0 + $0xbc] sm:$0xf]
          %v612 = vld [vmem:[%s0 + $0xc0] sm:$0xf]
          %v613 = vld [vmem:[%s0 + $0xc4] sm:$0xf]
          %v614 = vld [vmem:[%s0 + $0xc8] sm:$0xf]
          %v615 = vld [vmem:[%s0 + $0xcc] sm:$0xf]
          %v616 = vld [vmem:[%s0 + $0xd0] sm:$0xf]
          %v617 = vld [vmem:[%s0 + $0xd4] sm:$0xf]
          %v618 = vld [vmem:[%s0 + $0xd8] sm:$0xf]
          %v619 = vld [vmem:[%s0 + $0xdc] sm:$0xf]
          %v620 = vld [vmem:[%s0 + $0xe0] sm:$0xf]
          %v621 = vld [vmem:[%s0 + $0xe4] sm:$0xf]
          %v622 = vld [vmem:[%s0 + $0xe8] sm:$0xf]
          %v623 = vld [vmem:[%s0 + $0xec] sm:$0xf]
          %v624 = vld [vmem:[%s0 + $0xf0] sm:$0xf]
          %v625 = vld [vmem:[%s0 + $0xf4] sm:$0xf]
          %v626 = vld [vmem:[%s0 + $0xf8] sm:$0xf]
          %v627 = vld [vmem:[%s0 + $0xfc] sm:$0xf]
          %v628 = vld [vmem:[%s2] sm:$0xf]
          %v629 = vld [vmem:[%s2 + $0x4] sm:$0xf]
          %v630 = vld [vmem:[%s2 + $0x8] sm:$0xf]
          %v631 = vld [vmem:[%s2 + $0xc] sm:$0xf]
          %v632 = vld [vmem:[%s2 + $0x10] sm:$0x3]
          %v633 = vld [vmem:[%s4] sm:$0x1]
          %v634 = vperm.slane %v633, 0
          %v699 = vunpack.c.l.b16 %v564
          %v700 = vunpack.c.l.b16 %v565
          %v701 = vunpack.c.l.b16 %v566
          %v702 = vunpack.c.l.b16 %v567
          %v703 = vunpack.c.l.b16 %v568
          %v704 = vunpack.c.l.b16 %v569
          %v705 = vunpack.c.l.b16 %v570
          %v706 = vunpack.c.l.b16 %v571
          %v707 = vunpack.c.l.b16 %v572
          %v708 = vunpack.c.l.b16 %v573
          %v709 = vunpack.c.l.b16 %v574
          %v710 = vunpack.c.l.b16 %v575
          %v711 = vunpack.c.l.b16 %v576
          %v712 = vunpack.c.l.b16 %v577
          %v713 = vunpack.c.l.b16 %v578
          %v714 = vunpack.c.l.b16 %v579
          %v715 = vunpack.c.l.b16 %v580
          %v716 = vunpack.c.l.b16 %v581
          %v717 = vunpack.c.l.b16 %v582
          %v718 = vunpack.c.l.b16 %v583
          %v719 = vunpack.c.l.b16 %v584
          %v720 = vunpack.c.l.b16 %v585
          %v721 = vunpack.c.l.b16 %v586
          %v722 = vunpack.c.l.b16 %v587
          %v723 = vunpack.c.l.b16 %v588
          %v724 = vunpack.c.l.b16 %v589
          %v725 = vunpack.c.l.b16 %v590
          %v726 = vunpack.c.l.b16 %v591
          %v727 = vunpack.c.l.b16 %v592
          %v728 = vunpack.c.l.b16 %v593
          %v729 = vunpack.c.l.b16 %v594
          %v730 = vunpack.c.l.b16 %v595
          %v731 = vunpack.c.l.b16 %v596
          %v732 = vunpack.c.l.b16 %v597
          %v733 = vunpack.c.l.b16 %v598
          %v734 = vunpack.c.l.b16 %v599
          %v735 = vunpack.c.l.b16 %v600
          %v736 = vunpack.c.l.b16 %v601
          %v737 = vunpack.c.l.b16 %v602
          %v738 = vunpack.c.l.b16 %v603
          %v739 = vunpack.c.l.b16 %v604
          %v740 = vunpack.c.l.b16 %v605
          %v741 = vunpack.c.l.b16 %v606
          %v742 = vunpack.c.l.b16 %v607
          %v743 = vunpack.c.l.b16 %v608
          %v744 = vunpack.c.l.b16 %v609
          %v745 = vunpack.c.l.b16 %v610
          %v746 = vunpack.c.l.b16 %v611
          %v747 = vunpack.c.l.b16 %v612
          %v748 = vunpack.c.l.b16 %v613
          %v749 = vunpack.c.l.b16 %v614
          %v750 = vunpack.c.l.b16 %v615
          %v751 = vunpack.c.l.b16 %v616
          %v752 = vunpack.c.l.b16 %v617
          %v753 = vunpack.c.l.b16 %v618
          %v754 = vunpack.c.l.b16 %v619
          %v755 = vunpack.c.l.b16 %v620
          %v756 = vunpack.c.l.b16 %v621
          %v757 = vunpack.c.l.b16 %v622
          %v758 = vunpack.c.l.b16 %v623
          %v759 = vunpack.c.l.b16 %v624
          %v760 = vunpack.c.l.b16 %v625
          %v761 = vunpack.c.l.b16 %v626
          %v762 = vunpack.c.l.b16 %v627
          %v763 = vpack.c.b16 %v700, %v699
          %v764 = vpack.c.b16 %v702, %v701
          %v765 = vpack.c.b16 %v704, %v703
          %v766 = vpack.c.b16 %v706, %v705
          %v767 = vpack.c.b16 %v708, %v707
          %v768 = vpack.c.b16 %v710, %v709
          %v769 = vpack.c.b16 %v712, %v711
          %v770 = vpack.c.b16 %v714, %v713
          %v771 = vpack.c.b16 %v716, %v715
          %v772 = vpack.c.b16 %v718, %v717
          %v773 = vpack.c.b16 %v720, %v719
          %v774 = vpack.c.b16 %v722, %v721
          %v775 = vpack.c.b16 %v724, %v723
          %v776 = vpack.c.b16 %v726, %v725
          %v777 = vpack.c.b16 %v728, %v727
          %v778 = vpack.c.b16 %v730, %v729
          %v779 = vpack.c.b16 %v732, %v731
          %v780 = vpack.c.b16 %v734, %v733
          %v781 = vpack.c.b16 %v736, %v735
          %v782 = vpack.c.b16 %v738, %v737
          %v783 = vpack.c.b16 %v740, %v739
          %v784 = vpack.c.b16 %v742, %v741
          %v785 = vpack.c.b16 %v744, %v743
          %v786 = vpack.c.b16 %v746, %v745
          %v787 = vpack.c.b16 %v748, %v747
          %v788 = vpack.c.b16 %v750, %v749
          %v789 = vpack.c.b16 %v752, %v751
          %v790 = vpack.c.b16 %v754, %v753
          %v791 = vpack.c.b16 %v756, %v755
          %v792 = vpack.c.b16 %v758, %v757
          %v793 = vpack.c.b16 %v760, %v759
          %v794 = vpack.c.b16 %v762, %v761
          %v800 = vunpack.c.l.b16 %v628
          %v801 = vunpack.c.l.b16 %v629
          %v802 = vunpack.c.l.b16 %v630
          %v803 = vunpack.c.l.b16 %v631
          %v804 = vunpack.c.l.b16 %v632
          %v805 = vpack.c.b16 %v801, %v800
          %v806 = vpack.c.b16 %v803, %v802
          %v807 = vpack.c.b16 %v804, %v804
          %vm810 = vcmask 293888
          %v812 = vsel %vm810, %v763, 0
          %v815 = vsel %vm810, %v764, 0
          %v818 = vsel %vm810, %v765, 0
          %v821 = vsel %vm810, %v766, 0
          %v824 = vsel %vm810, %v767, 0
          %v827 = vsel %vm810, %v768, 0
          %v830 = vsel %vm810, %v769, 0
          %v833 = vsel %vm810, %v770, 0
          %v836 = vsel %vm810, %v771, 0
          %v839 = vsel %vm810, %v772, 0
          %v842 = vsel %vm810, %v773, 0
          %v845 = vsel %vm810, %v774, 0
          %v848 = vsel %vm810, %v775, 0
          %v851 = vsel %vm810, %v776, 0
          %v854 = vsel %vm810, %v777, 0
          %v857 = vsel %vm810, %v778, 0
          %v860 = vsel %vm810, %v779, 0
          %v863 = vsel %vm810, %v780, 0
          %v866 = vsel %vm810, %v781, 0
          %v869 = vsel %vm810, %v782, 0
          %v872 = vsel %vm810, %v783, 0
          %v875 = vsel %vm810, %v784, 0
          %v878 = vsel %vm810, %v785, 0
          %v881 = vsel %vm810, %v786, 0
          %v884 = vsel %vm810, %v787, 0
          %v887 = vsel %vm810, %v788, 0
          %v890 = vsel %vm810, %v789, 0
          %v893 = vsel %vm810, %v790, 0
          %v896 = vsel %vm810, %v791, 0
          %v899 = vsel %vm810, %v792, 0
          %v902 = vsel %vm810, %v793, 0
          %v905 = vsel %vm810, %v794, 0
          %vm907 = vcmask 1041408
          %v909 = vsel %vm907, %v807, 0
          %911 = vmatpush.bf16.msra.mxu0 0
          %912 = vmatpush.bf16.msra.mxu0 0
          %913 = vmatpush.bf16.msra.mxu0 0
          %914 = vmatpush.bf16.msra.mxu0 0
          %915 = vmatpush.bf16.msra.mxu0 0
          %916 = vmatpush.bf16.msra.mxu0 %v909
          %917 = vmatpush.bf16.msra.mxu0 %v806
          %918 = vmatpush.bf16.msra.mxu0 %v805
          %919 = vmatmul.bf16.gmra.mxu0 %v812
          %v920 = vpop.f32.mrf.mxu0
          %v921 = vadd.f32 %v634, %v920
          %v922 = vpop.f32.mrf.mxu0
          %v923 = vadd.f32 %v634, %v922
          %924 = vmatmul.bf16.gmra.mxu0 %v815
          %v925 = vpop.f32.mrf.mxu0
          %v926 = vadd.f32 %v634, %v925
          %v927 = vpop.f32.mrf.mxu0
          %v928 = vadd.f32 %v634, %v927
          %929 = vmatmul.bf16.gmra.mxu0 %v818
          %v930 = vpop.f32.mrf.mxu0
          %v931 = vadd.f32 %v634, %v930
          %v932 = vpop.f32.mrf.mxu0
          %v933 = vadd.f32 %v634, %v932
          %934 = vmatmul.bf16.gmra.mxu0 %v821
          %v935 = vpop.f32.mrf.mxu0
          %v936 = vadd.f32 %v634, %v935
          %v937 = vpop.f32.mrf.mxu0
          %v938 = vadd.f32 %v634, %v937
          %939 = vmatmul.bf16.gmra.mxu0 %v824
          %v940 = vpop.f32.mrf.mxu0
          %v941 = vadd.f32 %v634, %v940
          %v942 = vpop.f32.mrf.mxu0
          %v943 = vadd.f32 %v634, %v942
          %944 = vmatmul.bf16.gmra.mxu0 %v827
          %v945 = vpop.f32.mrf.mxu0
          %v946 = vadd.f32 %v634, %v945
          %v947 = vpop.f32.mrf.mxu0
          %v948 = vadd.f32 %v634, %v947
          %949 = vmatmul.bf16.gmra.mxu0 %v830
          %v950 = vpop.f32.mrf.mxu0
          %v951 = vadd.f32 %v634, %v950
          %v952 = vpop.f32.mrf.mxu0
          %v953 = vadd.f32 %v634, %v952
          %954 = vmatmul.bf16.gmra.mxu0 %v833
          %v955 = vpop.f32.mrf.mxu0
          %v956 = vadd.f32 %v634, %v955
          %v957 = vpop.f32.mrf.mxu0
          %v958 = vadd.f32 %v634, %v957
          %959 = vmatmul.bf16.gmra.mxu0 %v836
          %v960 = vpop.f32.mrf.mxu0
          %v961 = vadd.f32 %v634, %v960
          %v962 = vpop.f32.mrf.mxu0
          %v963 = vadd.f32 %v634, %v962
          %964 = vmatmul.bf16.gmra.mxu0 %v839
          %v965 = vpop.f32.mrf.mxu0
          %v966 = vadd.f32 %v634, %v965
          %v967 = vpop.f32.mrf.mxu0
          %v968 = vadd.f32 %v634, %v967
          %969 = vmatmul.bf16.gmra.mxu0 %v842
          %v970 = vpop.f32.mrf.mxu0
          %v971 = vadd.f32 %v634, %v970
          %v972 = vpop.f32.mrf.mxu0
          %v973 = vadd.f32 %v634, %v972
          %974 = vmatmul.bf16.gmra.mxu0 %v845
          %v975 = vpop.f32.mrf.mxu0
          %v976 = vadd.f32 %v634, %v975
          %v977 = vpop.f32.mrf.mxu0
          %v978 = vadd.f32 %v634, %v977
          %979 = vmatmul.bf16.gmra.mxu0 %v848
          %v980 = vpop.f32.mrf.mxu0
          %v981 = vadd.f32 %v634, %v980
          %v982 = vpop.f32.mrf.mxu0
          %v983 = vadd.f32 %v634, %v982
          %984 = vmatmul.bf16.gmra.mxu0 %v851
          %v985 = vpop.f32.mrf.mxu0
          %v986 = vadd.f32 %v634, %v985
          %v987 = vpop.f32.mrf.mxu0
          %v988 = vadd.f32 %v634, %v987
          %989 = vmatmul.bf16.gmra.mxu0 %v854
          %v990 = vpop.f32.mrf.mxu0
          %v991 = vadd.f32 %v634, %v990
          %v992 = vpop.f32.mrf.mxu0
          %v993 = vadd.f32 %v634, %v992
          %994 = vmatmul.bf16.gmra.mxu0 %v857
          %v995 = vpop.f32.mrf.mxu0
          %v996 = vadd.f32 %v634, %v995
          %v997 = vpop.f32.mrf.mxu0
          %v998 = vadd.f32 %v634, %v997
          %999 = vmatmul.bf16.gmra.mxu0 %v860
          %v1000 = vpop.f32.mrf.mxu0
          %v1001 = vadd.f32 %v634, %v1000
          %v1002 = vpop.f32.mrf.mxu0
          %v1003 = vadd.f32 %v634, %v1002
          %1004 = vmatmul.bf16.gmra.mxu0 %v863
          %v1005 = vpop.f32.mrf.mxu0
          %v1006 = vadd.f32 %v634, %v1005
          %v1007 = vpop.f32.mrf.mxu0
          %v1008 = vadd.f32 %v634, %v1007
          %1009 = vmatmul.bf16.gmra.mxu0 %v866
          %v1010 = vpop.f32.mrf.mxu0
          %v1011 = vadd.f32 %v634, %v1010
          %v1012 = vpop.f32.mrf.mxu0
          %v1013 = vadd.f32 %v634, %v1012
          %1014 = vmatmul.bf16.gmra.mxu0 %v869
          %v1015 = vpop.f32.mrf.mxu0
          %v1016 = vadd.f32 %v634, %v1015
          %v1017 = vpop.f32.mrf.mxu0
          %v1018 = vadd.f32 %v634, %v1017
          %1019 = vmatmul.bf16.gmra.mxu0 %v872
          %v1020 = vpop.f32.mrf.mxu0
          %v1021 = vadd.f32 %v634, %v1020
          %v1022 = vpop.f32.mrf.mxu0
          %v1023 = vadd.f32 %v634, %v1022
          %1024 = vmatmul.bf16.gmra.mxu0 %v875
          %v1025 = vpop.f32.mrf.mxu0
          %v1026 = vadd.f32 %v634, %v1025
          %v1027 = vpop.f32.mrf.mxu0
          %v1028 = vadd.f32 %v634, %v1027
          %1029 = vmatmul.bf16.gmra.mxu0 %v878
          %v1030 = vpop.f32.mrf.mxu0
          %v1031 = vadd.f32 %v634, %v1030
          %v1032 = vpop.f32.mrf.mxu0
          %v1033 = vadd.f32 %v634, %v1032
          %1034 = vmatmul.bf16.gmra.mxu0 %v881
          %v1035 = vpop.f32.mrf.mxu0
          %v1036 = vadd.f32 %v634, %v1035
          %v1037 = vpop.f32.mrf.mxu0
          %v1038 = vadd.f32 %v634, %v1037
          %1039 = vmatmul.bf16.gmra.mxu0 %v884
          %v1040 = vpop.f32.mrf.mxu0
          %v1041 = vadd.f32 %v634, %v1040
          %v1042 = vpop.f32.mrf.mxu0
          %v1043 = vadd.f32 %v634, %v1042
          %1044 = vmatmul.bf16.gmra.mxu0 %v887
          %v1045 = vpop.f32.mrf.mxu0
          %v1046 = vadd.f32 %v634, %v1045
          %v1047 = vpop.f32.mrf.mxu0
          %v1048 = vadd.f32 %v634, %v1047
          %1049 = vmatmul.bf16.gmra.mxu0 %v890
          %v1050 = vpop.f32.mrf.mxu0
          %v1051 = vadd.f32 %v634, %v1050
          %v1052 = vpop.f32.mrf.mxu0
          %v1053 = vadd.f32 %v634, %v1052
          %1054 = vmatmul.bf16.gmra.mxu0 %v893
          %v1055 = vpop.f32.mrf.mxu0
          %v1056 = vadd.f32 %v634, %v1055
          %v1057 = vpop.f32.mrf.mxu0
          %v1058 = vadd.f32 %v634, %v1057
          %1059 = vmatmul.bf16.gmra.mxu0 %v896
          %v1060 = vpop.f32.mrf.mxu0
          %v1061 = vadd.f32 %v634, %v1060
          %v1062 = vpop.f32.mrf.mxu0
          %v1063 = vadd.f32 %v634, %v1062
          %1064 = vmatmul.bf16.gmra.mxu0 %v899
          %v1065 = vpop.f32.mrf.mxu0
          %v1066 = vadd.f32 %v634, %v1065
          %v1067 = vpop.f32.mrf.mxu0
          %v1068 = vadd.f32 %v634, %v1067
          %1069 = vmatmul.bf16.gmra.mxu0 %v902
          %v1070 = vpop.f32.mrf.mxu0
          %v1071 = vadd.f32 %v634, %v1070
          %v1072 = vpop.f32.mrf.mxu0
          %v1073 = vadd.f32 %v634, %v1072
          %1074 = vmatmul.bf16.gmra.mxu0 %v905
          %v1075 = vpop.f32.mrf.mxu0
          %v1076 = vadd.f32 %v634, %v1075
          %v1077 = vpop.f32.mrf.mxu0
          %v1078 = vadd.f32 %v634, %v1077
          %1079 = vdwg.mxu0
          %v1080 = vmax.f32 %v921, 0.0
          %v1081 = vmax.f32 %v923, 0.0
          %v1082 = vmax.f32 %v926, 0.0
          %v1083 = vmax.f32 %v928, 0.0
          %v1084 = vmax.f32 %v931, 0.0
          %v1085 = vmax.f32 %v933, 0.0
          %v1086 = vmax.f32 %v936, 0.0
          %v1087 = vmax.f32 %v938, 0.0
          %v1088 = vmax.f32 %v941, 0.0
          %v1089 = vmax.f32 %v943, 0.0
          %v1090 = vmax.f32 %v946, 0.0
          %v1091 = vmax.f32 %v948, 0.0
          %v1092 = vmax.f32 %v951, 0.0
          %v1093 = vmax.f32 %v953, 0.0
          %v1094 = vmax.f32 %v956, 0.0
          %v1095 = vmax.f32 %v958, 0.0
          %v1096 = vmax.f32 %v961, 0.0
          %v1097 = vmax.f32 %v963, 0.0
          %v1098 = vmax.f32 %v966, 0.0
          %v1099 = vmax.f32 %v968, 0.0
          %v1100 = vmax.f32 %v971, 0.0
          %v1101 = vmax.f32 %v973, 0.0
          %v1102 = vmax.f32 %v976, 0.0
          %v1103 = vmax.f32 %v978, 0.0
          %v1104 = vmax.f32 %v981, 0.0
          %v1105 = vmax.f32 %v983, 0.0
          %v1106 = vmax.f32 %v986, 0.0
          %v1107 = vmax.f32 %v988, 0.0
          %v1108 = vmax.f32 %v991, 0.0
          %v1109 = vmax.f32 %v993, 0.0
          %v1110 = vmax.f32 %v996, 0.0
          %v1111 = vmax.f32 %v998, 0.0
          %v1112 = vmax.f32 %v1001, 0.0
          %v1113 = vmax.f32 %v1003, 0.0
          %v1114 = vmax.f32 %v1006, 0.0
          %v1115 = vmax.f32 %v1008, 0.0
          %v1116 = vmax.f32 %v1011, 0.0
          %v1117 = vmax.f32 %v1013, 0.0
          %v1118 = vmax.f32 %v1016, 0.0
          %v1119 = vmax.f32 %v1018, 0.0
          %v1120 = vmax.f32 %v1021, 0.0
          %v1121 = vmax.f32 %v1023, 0.0
          %v1122 = vmax.f32 %v1026, 0.0
          %v1123 = vmax.f32 %v1028, 0.0
          %v1124 = vmax.f32 %v1031, 0.0
          %v1125 = vmax.f32 %v1033, 0.0
          %v1126 = vmax.f32 %v1036, 0.0
          %v1127 = vmax.f32 %v1038, 0.0
          %v1128 = vmax.f32 %v1041, 0.0
          %v1129 = vmax.f32 %v1043, 0.0
          %v1130 = vmax.f32 %v1046, 0.0
          %v1131 = vmax.f32 %v1048, 0.0
          %v1132 = vmax.f32 %v1051, 0.0
          %v1133 = vmax.f32 %v1053, 0.0
          %v1134 = vmax.f32 %v1056, 0.0
          %v1135 = vmax.f32 %v1058, 0.0
          %v1136 = vmax.f32 %v1061, 0.0
          %v1137 = vmax.f32 %v1063, 0.0
          %v1138 = vmax.f32 %v1066, 0.0
          %v1139 = vmax.f32 %v1068, 0.0
          %v1140 = vmax.f32 %v1071, 0.0
          %v1141 = vmax.f32 %v1073, 0.0
          %v1142 = vmax.f32 %v1076, 0.0
          %v1143 = vmax.f32 %v1078, 0.0
          %vm1144 = vcmask 261120
          %v1145 = vsel %vm1144, %v1080, 0.0
          %v1146 = vsel %vm1144, %v1081, 0.0
          %v1147 = vadd.f32 %v1145, %v1146
          %v1148 = vsel %vm1144, %v1082, 0.0
          %v1149 = vadd.f32 %v1147, %v1148
          %v1150 = vsel %vm1144, %v1083, 0.0
          %v1151 = vadd.f32 %v1149, %v1150
          %v1152 = vsel %vm1144, %v1084, 0.0
          %v1153 = vadd.f32 %v1151, %v1152
          %v1154 = vsel %vm1144, %v1085, 0.0
          %v1155 = vadd.f32 %v1153, %v1154
          %v1156 = vsel %vm1144, %v1086, 0.0
          %v1157 = vadd.f32 %v1155, %v1156
          %v1158 = vsel %vm1144, %v1087, 0.0
          %v1159 = vadd.f32 %v1157, %v1158
          %v1160 = vrot.slane %v1159, 4
          %v1161 = vadd.f32 %v1159, %v1160
          %v1162 = vrot.slane %v1161, 2
          %v1163 = vadd.f32 %v1161, %v1162
          %v1164 = vrot.slane %v1163, 1
          %v1165 = vadd.f32 %v1163, %v1164
          %v1166 = vsel %vm1144, %v1088, 0.0
          %v1167 = vsel %vm1144, %v1089, 0.0
          %v1168 = vadd.f32 %v1166, %v1167
          %v1169 = vsel %vm1144, %v1090, 0.0
          %v1170 = vadd.f32 %v1168, %v1169
          %v1171 = vsel %vm1144, %v1091, 0.0
          %v1172 = vadd.f32 %v1170, %v1171
          %v1173 = vsel %vm1144, %v1092, 0.0
          %v1174 = vadd.f32 %v1172, %v1173
          %v1175 = vsel %vm1144, %v1093, 0.0
          %v1176 = vadd.f32 %v1174, %v1175
          %v1177 = vsel %vm1144, %v1094, 0.0
          %v1178 = vadd.f32 %v1176, %v1177
          %v1179 = vsel %vm1144, %v1095, 0.0
          %v1180 = vadd.f32 %v1178, %v1179
          %v1181 = vrot.slane %v1180, 4
          %v1182 = vadd.f32 %v1180, %v1181
          %v1183 = vrot.slane %v1182, 2
          %v1184 = vadd.f32 %v1182, %v1183
          %v1185 = vrot.slane %v1184, 1
          %v1186 = vadd.f32 %v1184, %v1185
          %v1187 = vsel %vm1144, %v1096, 0.0
          %v1188 = vsel %vm1144, %v1097, 0.0
          %v1189 = vadd.f32 %v1187, %v1188
          %v1190 = vsel %vm1144, %v1098, 0.0
          %v1191 = vadd.f32 %v1189, %v1190
          %v1192 = vsel %vm1144, %v1099, 0.0
          %v1193 = vadd.f32 %v1191, %v1192
          %v1194 = vsel %vm1144, %v1100, 0.0
          %v1195 = vadd.f32 %v1193, %v1194
          %v1196 = vsel %vm1144, %v1101, 0.0
          %v1197 = vadd.f32 %v1195, %v1196
          %v1198 = vsel %vm1144, %v1102, 0.0
          %v1199 = vadd.f32 %v1197, %v1198
          %v1200 = vsel %vm1144, %v1103, 0.0
          %v1201 = vadd.f32 %v1199, %v1200
          %v1202 = vrot.slane %v1201, 4
          %v1203 = vadd.f32 %v1201, %v1202
          %v1204 = vrot.slane %v1203, 2
          %v1205 = vadd.f32 %v1203, %v1204
          %v1206 = vrot.slane %v1205, 1
          %v1207 = vadd.f32 %v1205, %v1206
          %v1208 = vsel %vm1144, %v1104, 0.0
          %v1209 = vsel %vm1144, %v1105, 0.0
          %v1210 = vadd.f32 %v1208, %v1209
          %v1211 = vsel %vm1144, %v1106, 0.0
          %v1212 = vadd.f32 %v1210, %v1211
          %v1213 = vsel %vm1144, %v1107, 0.0
          %v1214 = vadd.f32 %v1212, %v1213
          %v1215 = vsel %vm1144, %v1108, 0.0
          %v1216 = vadd.f32 %v1214, %v1215
          %v1217 = vsel %vm1144, %v1109, 0.0
          %v1218 = vadd.f32 %v1216, %v1217
          %v1219 = vsel %vm1144, %v1110, 0.0
          %v1220 = vadd.f32 %v1218, %v1219
          %v1221 = vsel %vm1144, %v1111, 0.0
          %v1222 = vadd.f32 %v1220, %v1221
          %v1223 = vrot.slane %v1222, 4
          %v1224 = vadd.f32 %v1222, %v1223
          %v1225 = vrot.slane %v1224, 2
          %v1226 = vadd.f32 %v1224, %v1225
          %v1227 = vrot.slane %v1226, 1
          %v1228 = vadd.f32 %v1226, %v1227
          %v1229 = vsel %vm1144, %v1112, 0.0
          %v1230 = vsel %vm1144, %v1113, 0.0
          %v1231 = vadd.f32 %v1229, %v1230
          %v1232 = vsel %vm1144, %v1114, 0.0
          %v1233 = vadd.f32 %v1231, %v1232
          %v1234 = vsel %vm1144, %v1115, 0.0
          %v1235 = vadd.f32 %v1233, %v1234
          %v1236 = vsel %vm1144, %v1116, 0.0
          %v1237 = vadd.f32 %v1235, %v1236
          %v1238 = vsel %vm1144, %v1117, 0.0
          %v1239 = vadd.f32 %v1237, %v1238
          %v1240 = vsel %vm1144, %v1118, 0.0
          %v1241 = vadd.f32 %v1239, %v1240
          %v1242 = vsel %vm1144, %v1119, 0.0
          %v1243 = vadd.f32 %v1241, %v1242
          %v1244 = vrot.slane %v1243, 4
          %v1245 = vadd.f32 %v1243, %v1244
          %v1246 = vrot.slane %v1245, 2
          %v1247 = vadd.f32 %v1245, %v1246
          %v1248 = vrot.slane %v1247, 1
          %v1249 = vadd.f32 %v1247, %v1248
          %v1250 = vsel %vm1144, %v1120, 0.0
          %v1251 = vsel %vm1144, %v1121, 0.0
          %v1252 = vadd.f32 %v1250, %v1251
          %v1253 = vsel %vm1144, %v1122, 0.0
          %v1254 = vadd.f32 %v1252, %v1253
          %v1255 = vsel %vm1144, %v1123, 0.0
          %v1256 = vadd.f32 %v1254, %v1255
          %v1257 = vsel %vm1144, %v1124, 0.0
          %v1258 = vadd.f32 %v1256, %v1257
          %v1259 = vsel %vm1144, %v1125, 0.0
          %v1260 = vadd.f32 %v1258, %v1259
          %v1261 = vsel %vm1144, %v1126, 0.0
          %v1262 = vadd.f32 %v1260, %v1261
          %v1263 = vsel %vm1144, %v1127, 0.0
          %v1264 = vadd.f32 %v1262, %v1263
          %v1265 = vrot.slane %v1264, 4
          %v1266 = vadd.f32 %v1264, %v1265
          %v1267 = vrot.slane %v1266, 2
          %v1268 = vadd.f32 %v1266, %v1267
          %v1269 = vrot.slane %v1268, 1
          %v1270 = vadd.f32 %v1268, %v1269
          %v1271 = vsel %vm1144, %v1128, 0.0
          %v1272 = vsel %vm1144, %v1129, 0.0
          %v1273 = vadd.f32 %v1271, %v1272
          %v1274 = vsel %vm1144, %v1130, 0.0
          %v1275 = vadd.f32 %v1273, %v1274
          %v1276 = vsel %vm1144, %v1131, 0.0
          %v1277 = vadd.f32 %v1275, %v1276
          %v1278 = vsel %vm1144, %v1132, 0.0
          %v1279 = vadd.f32 %v1277, %v1278
          %v1280 = vsel %vm1144, %v1133, 0.0
          %v1281 = vadd.f32 %v1279, %v1280
          %v1282 = vsel %vm1144, %v1134, 0.0
          %v1283 = vadd.f32 %v1281, %v1282
          %v1284 = vsel %vm1144, %v1135, 0.0
          %v1285 = vadd.f32 %v1283, %v1284
          %v1286 = vrot.slane %v1285, 4
          %v1287 = vadd.f32 %v1285, %v1286
          %v1288 = vrot.slane %v1287, 2
          %v1289 = vadd.f32 %v1287, %v1288
          %v1290 = vrot.slane %v1289, 1
          %v1291 = vadd.f32 %v1289, %v1290
          %v1292 = vsel %vm1144, %v1136, 0.0
          %v1293 = vsel %vm1144, %v1137, 0.0
          %v1294 = vadd.f32 %v1292, %v1293
          %v1295 = vsel %vm1144, %v1138, 0.0
          %v1296 = vadd.f32 %v1294, %v1295
          %v1297 = vsel %vm1144, %v1139, 0.0
          %v1298 = vadd.f32 %v1296, %v1297
          %v1299 = vsel %vm1144, %v1140, 0.0
          %v1300 = vadd.f32 %v1298, %v1299
          %v1301 = vsel %vm1144, %v1141, 0.0
          %v1302 = vadd.f32 %v1300, %v1301
          %v1303 = vsel %vm1144, %v1142, 0.0
          %v1304 = vadd.f32 %v1302, %v1303
          %v1305 = vsel %vm1144, %v1143, 0.0
          %v1306 = vadd.f32 %v1304, %v1305
          %v1307 = vrot.slane %v1306, 4
          %v1308 = vadd.f32 %v1306, %v1307
          %v1309 = vrot.slane %v1308, 2
          %v1310 = vadd.f32 %v1308, %v1309
          %v1311 = vrot.slane %v1310, 1
          %v1312 = vadd.f32 %v1310, %v1311
          %v1313 = vrcp.pop 64.0
          %v1314 = vmul.f32 64.0, %v1313
          %v1315 = vsub.f32 1.0, %v1314
          %v1316 = vmul.f32 %v1313, %v1315
          %v1317 = vadd.f32 %v1313, %v1316
          %vm1318 = vweird.f32 %v1313
          %v1319 = vsel %vm1318, %v1313, %v1317
          %v1320 = vmul.f32 %v1165, %v1319
          %v1321 = vmul.f32 %v1186, %v1319
          %v1322 = vmul.f32 %v1207, %v1319
          %v1323 = vmul.f32 %v1228, %v1319
          %v1324 = vmul.f32 %v1249, %v1319
          %v1325 = vmul.f32 %v1270, %v1319
          %v1326 = vmul.f32 %v1291, %v1319
          %v1327 = vmul.f32 %v1312, %v1319
          %v1328 = vld [vmem:[%s1] sm:$0xff]
          %v1329 = vld [vmem:[%s1 + $0x8] sm:$0xff]
          %v1330 = vld [vmem:[%s1 + $0x10] sm:$0xff]
          %v1331 = vld [vmem:[%s1 + $0x18] sm:$0xff]
          %v1332 = vld [vmem:[%s1 + $0x20] sm:$0xff]
          %v1333 = vld [vmem:[%s1 + $0x28] sm:$0xff]
          %v1334 = vld [vmem:[%s1 + $0x30] sm:$0xff]
          %v1335 = vld [vmem:[%s1 + $0x38] sm:$0xff]
          %v1336 = vld [vmem:[%s1 + $0x40] sm:$0xff]
          %v1337 = vld [vmem:[%s1 + $0x48] sm:$0xff]
          %v1338 = vld [vmem:[%s1 + $0x50] sm:$0xff]
          %v1339 = vld [vmem:[%s1 + $0x58] sm:$0xff]
          %v1340 = vld [vmem:[%s1 + $0x60] sm:$0xff]
          %v1341 = vld [vmem:[%s1 + $0x68] sm:$0xff]
          %v1342 = vld [vmem:[%s1 + $0x70] sm:$0xff]
          %v1343 = vld [vmem:[%s1 + $0x78] sm:$0xff]
          %v1344 = vld [vmem:[%s1 + $0x80] sm:$0xff]
          %v1345 = vld [vmem:[%s1 + $0x88] sm:$0xff]
          %v1346 = vld [vmem:[%s1 + $0x90] sm:$0xff]
          %v1347 = vld [vmem:[%s1 + $0x98] sm:$0xff]
          %v1348 = vld [vmem:[%s1 + $0xa0] sm:$0xff]
          %v1349 = vld [vmem:[%s1 + $0xa8] sm:$0xff]
          %v1350 = vld [vmem:[%s1 + $0xb0] sm:$0xff]
          %v1351 = vld [vmem:[%s1 + $0xb8] sm:$0xff]
          %v1352 = vld [vmem:[%s1 + $0xc0] sm:$0xff]
          %v1353 = vld [vmem:[%s1 + $0xc8] sm:$0xff]
          %v1354 = vld [vmem:[%s1 + $0xd0] sm:$0xff]
          %v1355 = vld [vmem:[%s1 + $0xd8] sm:$0xff]
          %v1356 = vld [vmem:[%s1 + $0xe0] sm:$0xff]
          %v1357 = vld [vmem:[%s1 + $0xe8] sm:$0xff]
          %v1358 = vld [vmem:[%s1 + $0xf0] sm:$0xff]
          %v1359 = vld [vmem:[%s1 + $0xf8] sm:$0xff]
          %v1360 = vld [vmem:[%s1 + $0x100] sm:$0xff]
          %v1361 = vld [vmem:[%s1 + $0x108] sm:$0xff]
          %v1362 = vld [vmem:[%s1 + $0x110] sm:$0xff]
          %v1363 = vld [vmem:[%s1 + $0x118] sm:$0xff]
          %v1364 = vld [vmem:[%s1 + $0x120] sm:$0xff]
          %v1365 = vld [vmem:[%s1 + $0x128] sm:$0xff]
          %v1366 = vld [vmem:[%s1 + $0x130] sm:$0xff]
          %v1367 = vld [vmem:[%s1 + $0x138] sm:$0xff]
          %v1368 = vld [vmem:[%s1 + $0x140] sm:$0xff]
          %v1369 = vld [vmem:[%s1 + $0x148] sm:$0xff]
          %v1370 = vld [vmem:[%s1 + $0x150] sm:$0xff]
          %v1371 = vld [vmem:[%s1 + $0x158] sm:$0xff]
          %v1372 = vld [vmem:[%s1 + $0x160] sm:$0xff]
          %v1373 = vld [vmem:[%s1 + $0x168] sm:$0xff]
          %v1374 = vld [vmem:[%s1 + $0x170] sm:$0xff]
          %v1375 = vld [vmem:[%s1 + $0x178] sm:$0xff]
          %v1376 = vld [vmem:[%s1 + $0x180] sm:$0xff]
          %v1377 = vld [vmem:[%s1 + $0x188] sm:$0xff]
          %v1378 = vld [vmem:[%s1 + $0x190] sm:$0xff]
          %v1379 = vld [vmem:[%s1 + $0x198] sm:$0xff]
          %v1380 = vld [vmem:[%s1 + $0x1a0] sm:$0xff]
          %v1381 = vld [vmem:[%s1 + $0x1a8] sm:$0xff]
          %v1382 = vld [vmem:[%s1 + $0x1b0] sm:$0xff]
          %v1383 = vld [vmem:[%s1 + $0x1b8] sm:$0xff]
          %v1384 = vld [vmem:[%s1 + $0x1c0] sm:$0xff]
          %v1385 = vld [vmem:[%s1 + $0x1c8] sm:$0xff]
          %v1386 = vld [vmem:[%s1 + $0x1d0] sm:$0xff]
          %v1387 = vld [vmem:[%s1 + $0x1d8] sm:$0xff]
          %v1388 = vld [vmem:[%s1 + $0x1e0] sm:$0xff]
          %v1389 = vld [vmem:[%s1 + $0x1e8] sm:$0xff]
          %v1390 = vld [vmem:[%s1 + $0x1f0] sm:$0xff]
          %v1391 = vld [vmem:[%s1 + $0x1f8] sm:$0xff]
          %v1392 = vsel %vm1144, %v1328, 0.0
          %v1393 = vsel %vm1144, %v1329, 0.0
          %v1394 = vadd.f32 %v1392, %v1393
          %v1395 = vsel %vm1144, %v1330, 0.0
          %v1396 = vadd.f32 %v1394, %v1395
          %v1397 = vsel %vm1144, %v1331, 0.0
          %v1398 = vadd.f32 %v1396, %v1397
          %v1399 = vsel %vm1144, %v1332, 0.0
          %v1400 = vadd.f32 %v1398, %v1399
          %v1401 = vsel %vm1144, %v1333, 0.0
          %v1402 = vadd.f32 %v1400, %v1401
          %v1403 = vsel %vm1144, %v1334, 0.0
          %v1404 = vadd.f32 %v1402, %v1403
          %v1405 = vsel %vm1144, %v1335, 0.0
          %v1406 = vadd.f32 %v1404, %v1405
          %v1407 = vrot.slane %v1406, 4
          %v1408 = vadd.f32 %v1406, %v1407
          %v1409 = vrot.slane %v1408, 2
          %v1410 = vadd.f32 %v1408, %v1409
          %v1411 = vrot.slane %v1410, 1
          %v1412 = vadd.f32 %v1410, %v1411
          %v1413 = vsel %vm1144, %v1336, 0.0
          %v1414 = vsel %vm1144, %v1337, 0.0
          %v1415 = vadd.f32 %v1413, %v1414
          %v1416 = vsel %vm1144, %v1338, 0.0
          %v1417 = vadd.f32 %v1415, %v1416
          %v1418 = vsel %vm1144, %v1339, 0.0
          %v1419 = vadd.f32 %v1417, %v1418
          %v1420 = vsel %vm1144, %v1340, 0.0
          %v1421 = vadd.f32 %v1419, %v1420
          %v1422 = vsel %vm1144, %v1341, 0.0
          %v1423 = vadd.f32 %v1421, %v1422
          %v1424 = vsel %vm1144, %v1342, 0.0
          %v1425 = vadd.f32 %v1423, %v1424
          %v1426 = vsel %vm1144, %v1343, 0.0
          %v1427 = vadd.f32 %v1425, %v1426
          %v1428 = vrot.slane %v1427, 4
          %v1429 = vadd.f32 %v1427, %v1428
          %v1430 = vrot.slane %v1429, 2
          %v1431 = vadd.f32 %v1429, %v1430
          %v1432 = vrot.slane %v1431, 1
          %v1433 = vadd.f32 %v1431, %v1432
          %v1434 = vsel %vm1144, %v1344, 0.0
          %v1435 = vsel %vm1144, %v1345, 0.0
          %v1436 = vadd.f32 %v1434, %v1435
          %v1437 = vsel %vm1144, %v1346, 0.0
          %v1438 = vadd.f32 %v1436, %v1437
          %v1439 = vsel %vm1144, %v1347, 0.0
          %v1440 = vadd.f32 %v1438, %v1439
          %v1441 = vsel %vm1144, %v1348, 0.0
          %v1442 = vadd.f32 %v1440, %v1441
          %v1443 = vsel %vm1144, %v1349, 0.0
          %v1444 = vadd.f32 %v1442, %v1443
          %v1445 = vsel %vm1144, %v1350, 0.0
          %v1446 = vadd.f32 %v1444, %v1445
          %v1447 = vsel %vm1144, %v1351, 0.0
          %v1448 = vadd.f32 %v1446, %v1447
          %v1449 = vrot.slane %v1448, 4
          %v1450 = vadd.f32 %v1448, %v1449
          %v1451 = vrot.slane %v1450, 2
          %v1452 = vadd.f32 %v1450, %v1451
          %v1453 = vrot.slane %v1452, 1
          %v1454 = vadd.f32 %v1452, %v1453
          %v1455 = vsel %vm1144, %v1352, 0.0
          %v1456 = vsel %vm1144, %v1353, 0.0
          %v1457 = vadd.f32 %v1455, %v1456
          %v1458 = vsel %vm1144, %v1354, 0.0
          %v1459 = vadd.f32 %v1457, %v1458
          %v1460 = vsel %vm1144, %v1355, 0.0
          %v1461 = vadd.f32 %v1459, %v1460
          %v1462 = vsel %vm1144, %v1356, 0.0
          %v1463 = vadd.f32 %v1461, %v1462
          %v1464 = vsel %vm1144, %v1357, 0.0
          %v1465 = vadd.f32 %v1463, %v1464
          %v1466 = vsel %vm1144, %v1358, 0.0
          %v1467 = vadd.f32 %v1465, %v1466
          %v1468 = vsel %vm1144, %v1359, 0.0
          %v1469 = vadd.f32 %v1467, %v1468
          %v1470 = vrot.slane %v1469, 4
          %v1471 = vadd.f32 %v1469, %v1470
          %v1472 = vrot.slane %v1471, 2
          %v1473 = vadd.f32 %v1471, %v1472
          %v1474 = vrot.slane %v1473, 1
          %v1475 = vadd.f32 %v1473, %v1474
          %v1476 = vsel %vm1144, %v1360, 0.0
          %v1477 = vsel %vm1144, %v1361, 0.0
          %v1478 = vadd.f32 %v1476, %v1477
          %v1479 = vsel %vm1144, %v1362, 0.0
          %v1480 = vadd.f32 %v1478, %v1479
          %v1481 = vsel %vm1144, %v1363, 0.0
          %v1482 = vadd.f32 %v1480, %v1481
          %v1483 = vsel %vm1144, %v1364, 0.0
          %v1484 = vadd.f32 %v1482, %v1483
          %v1485 = vsel %vm1144, %v1365, 0.0
          %v1486 = vadd.f32 %v1484, %v1485
          %v1487 = vsel %vm1144, %v1366, 0.0
          %v1488 = vadd.f32 %v1486, %v1487
          %v1489 = vsel %vm1144, %v1367, 0.0
          %v1490 = vadd.f32 %v1488, %v1489
          %v1491 = vrot.slane %v1490, 4
          %v1492 = vadd.f32 %v1490, %v1491
          %v1493 = vrot.slane %v1492, 2
          %v1494 = vadd.f32 %v1492, %v1493
          %v1495 = vrot.slane %v1494, 1
          %v1496 = vadd.f32 %v1494, %v1495
          %v1497 = vsel %vm1144, %v1368, 0.0
          %v1498 = vsel %vm1144, %v1369, 0.0
          %v1499 = vadd.f32 %v1497, %v1498
          %v1500 = vsel %vm1144, %v1370, 0.0
          %v1501 = vadd.f32 %v1499, %v1500
          %v1502 = vsel %vm1144, %v1371, 0.0
          %v1503 = vadd.f32 %v1501, %v1502
          %v1504 = vsel %vm1144, %v1372, 0.0
          %v1505 = vadd.f32 %v1503, %v1504
          %v1506 = vsel %vm1144, %v1373, 0.0
          %v1507 = vadd.f32 %v1505, %v1506
          %v1508 = vsel %vm1144, %v1374, 0.0
          %v1509 = vadd.f32 %v1507, %v1508
          %v1510 = vsel %vm1144, %v1375, 0.0
          %v1511 = vadd.f32 %v1509, %v1510
          %v1512 = vrot.slane %v1511, 4
          %v1513 = vadd.f32 %v1511, %v1512
          %v1514 = vrot.slane %v1513, 2
          %v1515 = vadd.f32 %v1513, %v1514
          %v1516 = vrot.slane %v1515, 1
          %v1517 = vadd.f32 %v1515, %v1516
          %v1518 = vsel %vm1144, %v1376, 0.0
          %v1519 = vsel %vm1144, %v1377, 0.0
          %v1520 = vadd.f32 %v1518, %v1519
          %v1521 = vsel %vm1144, %v1378, 0.0
          %v1522 = vadd.f32 %v1520, %v1521
          %v1523 = vsel %vm1144, %v1379, 0.0
          %v1524 = vadd.f32 %v1522, %v1523
          %v1525 = vsel %vm1144, %v1380, 0.0
          %v1526 = vadd.f32 %v1524, %v1525
          %v1527 = vsel %vm1144, %v1381, 0.0
          %v1528 = vadd.f32 %v1526, %v1527
          %v1529 = vsel %vm1144, %v1382, 0.0
          %v1530 = vadd.f32 %v1528, %v1529
          %v1531 = vsel %vm1144, %v1383, 0.0
          %v1532 = vadd.f32 %v1530, %v1531
          %v1533 = vrot.slane %v1532, 4
          %v1534 = vadd.f32 %v1532, %v1533
          %v1535 = vrot.slane %v1534, 2
          %v1536 = vadd.f32 %v1534, %v1535
          %v1537 = vrot.slane %v1536, 1
          %v1538 = vadd.f32 %v1536, %v1537
          %v1539 = vsel %vm1144, %v1384, 0.0
          %v1540 = vsel %vm1144, %v1385, 0.0
          %v1541 = vadd.f32 %v1539, %v1540
          %v1542 = vsel %vm1144, %v1386, 0.0
          %v1543 = vadd.f32 %v1541, %v1542
          %v1544 = vsel %vm1144, %v1387, 0.0
          %v1545 = vadd.f32 %v1543, %v1544
          %v1546 = vsel %vm1144, %v1388, 0.0
          %v1547 = vadd.f32 %v1545, %v1546
          %v1548 = vsel %vm1144, %v1389, 0.0
          %v1549 = vadd.f32 %v1547, %v1548
          %v1550 = vsel %vm1144, %v1390, 0.0
          %v1551 = vadd.f32 %v1549, %v1550
          %v1552 = vsel %vm1144, %v1391, 0.0
          %v1553 = vadd.f32 %v1551, %v1552
          %v1554 = vrot.slane %v1553, 4
          %v1555 = vadd.f32 %v1553, %v1554
          %v1556 = vrot.slane %v1555, 2
          %v1557 = vadd.f32 %v1555, %v1556
          %v1558 = vrot.slane %v1557, 1
          %v1559 = vadd.f32 %v1557, %v1558
          %v1560 = vmul.f32 %v1412, %v1319
          %v1561 = vmul.f32 %v1433, %v1319
          %v1562 = vmul.f32 %v1454, %v1319
          %v1563 = vmul.f32 %v1475, %v1319
          %v1564 = vmul.f32 %v1496, %v1319
          %v1565 = vmul.f32 %v1517, %v1319
          %v1566 = vmul.f32 %v1538, %v1319
          %v1567 = vmul.f32 %v1559, %v1319
          %vm1576 = vcmask 1041409
          %v1577 = vsel %vm1576, %v1561, %v1560
          %vm1578 = vcmask 1042434
          %v1579 = vsel %vm1578, %v1562, %v1577
          %vm1580 = vcmask 1043459
          %v1581 = vsel %vm1580, %v1563, %v1579
          %vm1582 = vcmask 1044484
          %v1583 = vsel %vm1582, %v1564, %v1581
          %vm1584 = vcmask 1045509
          %v1585 = vsel %vm1584, %v1565, %v1583
          %vm1586 = vcmask 1046534
          %v1587 = vsel %vm1586, %v1566, %v1585
          %vm1588 = vcmask 1047559
          %v1589 = vsel %vm1588, %v1567, %v1587
          %v1599 = vsel %vm1576, %v1321, %v1320
          %v1600 = vsel %vm1578, %v1322, %v1599
          %v1601 = vsel %vm1580, %v1323, %v1600
          %v1602 = vsel %vm1582, %v1324, %v1601
          %v1603 = vsel %vm1584, %v1325, %v1602
          %v1604 = vsel %vm1586, %v1326, %v1603
          %v1605 = vsel %vm1588, %v1327, %v1604
          %1606 = vrot.lane.b32.xlu0 %v1605, 32
          %v1607 = vpop.permute.xlu0 %1606
          %v1609 = vsel %vm1144, %v1589, %v1607
          %v1610 = vpack.c.bf16 %v1609, %v1609
          %v1611 = vld [vmem:[%s3] sm:$0xf]
          %v1612 = vld [vmem:[%s3 + $0x4] sm:$0xf]
          %v1613 = vld [vmem:[%s3 + $0x8] sm:$0xf]
          %v1614 = vld [vmem:[%s3 + $0xc] sm:$0xf]
          %v1615 = vld [vmem:[%s3 + $0x10] sm:$0xf]
          %v1616 = vld [vmem:[%s3 + $0x14] sm:$0xf]
          %v1617 = vld [vmem:[%s3 + $0x18] sm:$0xf]
          %v1618 = vld [vmem:[%s3 + $0x1c] sm:$0xf]
          %v1619 = vld [vmem:[%s4 + $0x1] sm:$0x1]
          %v1620 = vperm.slane %v1619, 0
          %v1629 = vunpack.c.l.b16 %v1611
          %v1630 = vunpack.c.l.b16 %v1612
          %v1631 = vunpack.c.l.b16 %v1613
          %v1632 = vunpack.c.l.b16 %v1614
          %v1633 = vunpack.c.l.b16 %v1615
          %v1634 = vunpack.c.l.b16 %v1616
          %v1635 = vunpack.c.l.b16 %v1617
          %v1636 = vunpack.c.l.b16 %v1618
          %v1637 = vpack.c.b16 %v1630, %v1629
          %v1638 = vpack.c.b16 %v1632, %v1631
          %v1639 = vpack.c.b16 %v1634, %v1633
          %v1640 = vpack.c.b16 %v1636, %v1635
          %vm1645 = vcmask 523264
          %v1647 = vsel %vm1645, %v1610, 0
          %1649 = vmatpush.bf16.msra.mxu0 0
          %1650 = vmatpush.bf16.msra.mxu0 0
          %1651 = vmatpush.bf16.msra.mxu0 0
          %1652 = vmatpush.bf16.msra.mxu0 0
          %1653 = vmatpush.bf16.msra.mxu0 %v1640
          %1654 = vmatpush.bf16.msra.mxu0 %v1639
          %1655 = vmatpush.bf16.msra.mxu0 %v1638
          %1656 = vmatpush.bf16.msra.mxu0 %v1637
          %1657 = vmatmul.bf16.gmra.mxu0 %v1647
          %v1658 = vpop.f32.mrf.mxu0
          %v1659 = vadd.f32 %v1620, %v1658
          %v1660 = vpop.f32.mrf.mxu0
          %1661 = vdwg.mxu0
          %v1662 = vmul.f32 %v1659, 0.5
          %v1663 = vmul.f32 %v1659, 0.044715
          %v1664 = vmul.f32 %v1663, %v1659
          %v1665 = vmul.f32 %v1664, %v1659
          %v1666 = vadd.f32 %v1659, %v1665
          %v1667 = vmul.f32 %v1666, 0.7978846
          %v1668 = vtanh.pop %v1667
          %v1669 = vadd.f32 %v1668, 1.0
          %v1670 = vmul.f32 %v1662, %v1669
          %v1671 = vld [vmem:[%s4 + $0x2] sm:$0x1]
          %v1672 = vld [vmem:[%s4 + $0x3] sm:$0x1]
          %v1673 = vsel %vm1144, %v1670, 0.0
          %1674 = vadd.xlane.f32.xlu0 %v1673
          %v1675 = vpop.xlane.xlu0 %1674
          %v1676 = vrcp.pop 32.0
          %v1677 = vmul.f32 32.0, %v1676
          %v1678 = vsub.f32 1.0, %v1677
          %v1679 = vmul.f32 %v1676, %v1678
          %v1680 = vadd.f32 %v1676, %v1679
          %vm1681 = vweird.f32 %v1676
          %v1682 = vsel %vm1681, %v1676, %v1680
          %v1683 = vmul.f32 %v1675, %v1682
          %v1684 = vsub.f32 %v1670, %v1683
          %v1685 = vmul.f32 %v1684, %v1684
          %v1686 = vsel %vm1144, %v1685, 0.0
          %1687 = vadd.xlane.f32.xlu0 %v1686
          %v1688 = vpop.xlane.xlu0 %1687
          %v1689 = vmul.f32 %v1688, %v1682
          %v1690 = vadd.f32 %v1689, 1e-05
          %v1691 = vrsqrt.pop %v1690
          %v1692 = vmul.f32 %v1691, %v1690
          %v1693 = vmul.f32 %v1692, %v1691
          %v1694 = vmul.f32 0.5, %v1693
          %v1695 = vsub.f32 1.5, %v1694
          %v1696 = vmul.f32 %v1691, %v1695
          %vm1697 = vweird.f32 %v1690
          %vm1698 = vweird.f32 %v1691
          %vm1699 = vmor %vm1697, %vm1698
          %v1700 = vsel %vm1699, %v1691, %v1696
          %v1701 = vmul.f32 %v1684, %v1700
          %v1702 = vperm.slane %v1671, 0
          %v1703 = vmul.f32 %v1701, %v1702
          %v1704 = vperm.slane %v1672, 0
          %v1705 = vadd.f32 %v1703, %v1704
          %1706 = vst.msk [vmem:[#allocation2] sm:$0xff] %vm1144, %v1705
        $region80: #{tpu_custom_call.1} parent=75 // pred_fallthru
          _
        %v1707 = vld [vmem:[#allocation2] sm:$0xff]
        %v1708 = vld [vmem:[%s555] sm:$0x3f]
        %v1709 = vpack.c.bf16 %v1707, %v1707
        %v1710 = vld [vmem:[%s533] sm:$0xf]
        %v1711 = vld [vmem:[%s533 + $0x4] sm:$0xf]
        %v1712 = vld [vmem:[%s533 + $0x8] sm:$0xf]
        %v1713 = vld [vmem:[%s533 + $0xc] sm:$0xf]
        %v1714 = vld [vmem:[%s551] sm:$0x1]
        %v1716 = vperm.slane %v1714, 0
        %v1722 = vunpack.c.l.b16 %v1710
        %v1723 = vunpack.c.l.b16 %v1711
        %v1724 = vunpack.c.l.b16 %v1712
        %v1725 = vunpack.c.l.b16 %v1713
        %v1726 = vpack.c.b16 %v1723, %v1722
        %v1727 = vpack.c.b16 %v1725, %v1724
        %vm1730 = vcmask 261120
        %v1732 = vsel %vm1730, %v1709, 0
        %1734 = vmatpush.bf16.msra.mxu0 0
        %1735 = vmatpush.bf16.msra.mxu0 0
        %1736 = vmatpush.bf16.msra.mxu0 0
        %1737 = vmatpush.bf16.msra.mxu0 0
        %1738 = vmatpush.bf16.msra.mxu0 0
        %1739 = vmatpush.bf16.msra.mxu0 0
        %1740 = vmatpush.bf16.msra.mxu0 %v1727
        %1741 = vmatpush.bf16.msra.mxu0 %v1726
        %1742 = vmatmul.bf16.gmra.mxu0 %v1732
        %v1743 = vpop.f32.mrf.mxu0
        %v1744 = vadd.f32 %v1716, %v1743
        %v1745 = vpop.f32.mrf.mxu0
        %1746 = vdwg.mxu0
        %v1747 = vmul.f32 %v1744, 0.35355338
        %v1748 = vpack.c.bf16 %v1747, %v1747
        %v1749 = vpack.c.bf16 %v1744, %v1744
        %1751 = vrot.lane.b32.xlu0 %v1749, 96
        %v1752 = vpop.permute.xlu0 %1751
        %vm1753 = vcmask 64512
        %v1755 = vsel %vm1753, %v1748, 0
        %v1758 = vsel %vm1753, %v1752, 0
        %1760 = vmatpush.bf16.xpose.msra.mxu0 0
        %1761 = vmatpush.bf16.xpose.msra.mxu0 0
        %1762 = vmatpush.bf16.xpose.msra.mxu0 0
        %1763 = vmatpush.bf16.xpose.msra.mxu0 0
        %1764 = vmatpush.bf16.xpose.msra.mxu0 0
        %1765 = vmatpush.bf16.xpose.msra.mxu0 0
        %1766 = vmatpush.bf16.xpose.msra.mxu0 0
        %1767 = vmatpush.bf16.xpose.msra.mxu0 %v1758
        %1768 = vmatmul.bf16.gmra.mxu0 %v1755
        %v1769 = vpop.f32.mrf.mxu0
        %v1770 = vadd.f32 0.0, %v1769
        %v1771 = vpop.f32.mrf.mxu0
        %1772 = vdwg.mxu0
        %v1773 = vsel %vm1753, %v1770, -inf
        %1774 = vmax.xlane.f32.xlu0 %v1773
        %v1775 = vpop.xlane.xlu0 %1774
        %v1776 = vsub.f32 %v1770, %v1775
        %v1777 = vmul.f32 %v1776, 1.442695
        %v1778 = vpow.pop %v1777
        %v1779 = vsel %vm1753, %v1778, 0.0
        %1780 = vadd.xlane.f32.xlu0 %v1779
        %v1781 = vpop.xlane.xlu0 %1780
        %v1782 = vrcp.pop %v1781
        %v1783 = vmul.f32 %v1778, %v1782
        %v1784 = vpack.c.bf16 %v1783, %v1783
        %1785 = vrot.lane.b32.xlu0 %v1749, 64
        %v1786 = vpop.permute.xlu0 %1785
        %v1788 = vsel %vm1753, %v1784, 0
        %vm1790 = vcmask 1043456
        %v1792 = vsel %vm1790, %v1786, 0
        %1794 = vmatpush.bf16.msra.mxu0 0
        %1795 = vmatpush.bf16.msra.mxu0 0
        %1796 = vmatpush.bf16.msra.mxu0 0
        %1797 = vmatpush.bf16.msra.mxu0 0
        %1798 = vmatpush.bf16.msra.mxu0 0
        %1799 = vmatpush.bf16.msra.mxu0 0
        %1800 = vmatpush.bf16.msra.mxu0 0
        %1801 = vmatpush.bf16.msra.mxu0 %v1792
        %1802 = vmatmul.bf16.gmra.mxu0 %v1788
        %v1803 = vpop.f32.mrf.mxu0
        %v1804 = vadd.f32 0.0, %v1803
        %v1805 = vpop.f32.mrf.mxu0
        %1806 = vdwg.mxu0
        %1808 = vrot.lane.b32.xlu0 %v1748, 120
        %v1809 = vpop.permute.xlu0 %1808
        %1810 = vrot.lane.b32.xlu0 %v1749, 88
        %v1811 = vpop.permute.xlu0 %1810
        %v1813 = vsel %vm1753, %v1809, 0
        %v1816 = vsel %vm1753, %v1811, 0
        %1818 = vmatpush.bf16.xpose.msra.mxu0 0
        %1819 = vmatpush.bf16.xpose.msra.mxu0 0
        %1820 = vmatpush.bf16.xpose.msra.mxu0 0
        %1821 = vmatpush.bf16.xpose.msra.mxu0 0
        %1822 = vmatpush.bf16.xpose.msra.mxu0 0
        %1823 = vmatpush.bf16.xpose.msra.mxu0 0
        %1824 = vmatpush.bf16.xpose.msra.mxu0 0
        %1825 = vmatpush.bf16.xpose.msra.mxu0 %v1816
        %1826 = vmatmul.bf16.gmra.mxu0 %v1813
        %v1827 = vpop.f32.mrf.mxu0
        %v1828 = vadd.f32 0.0, %v1827
        %v1829 = vpop.f32.mrf.mxu0
        %1830 = vdwg.mxu0
        %v1831 = vsel %vm1753, %v1828, -inf
        %1832 = vmax.xlane.f32.xlu0 %v1831
        %v1833 = vpop.xlane.xlu0 %1832
        %v1834 = vsub.f32 %v1828, %v1833
        %v1835 = vmul.f32 %v1834, 1.442695
        %v1836 = vpow.pop %v1835
        %v1837 = vsel %vm1753, %v1836, 0.0
        %1838 = vadd.xlane.f32.xlu0 %v1837
        %v1839 = vpop.xlane.xlu0 %1838
        %v1840 = vrcp.pop %v1839
        %v1841 = vmul.f32 %v1836, %v1840
        %v1842 = vpack.c.bf16 %v1841, %v1841
        %1843 = vrot.lane.b32.xlu0 %v1749, 56
        %v1844 = vpop.permute.xlu0 %1843
        %v1846 = vsel %vm1753, %v1842, 0
        %v1849 = vsel %vm1790, %v1844, 0
        %1851 = vmatpush.bf16.msra.mxu0 0
        %1852 = vmatpush.bf16.msra.mxu0 0
        %1853 = vmatpush.bf16.msra.mxu0 0
        %1854 = vmatpush.bf16.msra.mxu0 0
        %1855 = vmatpush.bf16.msra.mxu0 0
        %1856 = vmatpush.bf16.msra.mxu0 0
        %1857 = vmatpush.bf16.msra.mxu0 0
        %1858 = vmatpush.bf16.msra.mxu0 %v1849
        %1859 = vmatmul.bf16.gmra.mxu0 %v1846
        %v1860 = vpop.f32.mrf.mxu0
        %v1861 = vadd.f32 0.0, %v1860
        %v1862 = vpop.f32.mrf.mxu0
        %1863 = vdwg.mxu0
        %1864 = vrot.lane.b32.xlu0 %v1748, 112
        %v1865 = vpop.permute.xlu0 %1864
        %1866 = vrot.lane.b32.xlu0 %v1749, 80
        %v1867 = vpop.permute.xlu0 %1866
        %v1869 = vsel %vm1753, %v1865, 0
        %v1872 = vsel %vm1753, %v1867, 0
        %1874 = vmatpush.bf16.xpose.msra.mxu0 0
        %1875 = vmatpush.bf16.xpose.msra.mxu0 0
        %1876 = vmatpush.bf16.xpose.msra.mxu0 0
        %1877 = vmatpush.bf16.xpose.msra.mxu0 0
        %1878 = vmatpush.bf16.xpose.msra.mxu0 0
        %1879 = vmatpush.bf16.xpose.msra.mxu0 0
        %1880 = vmatpush.bf16.xpose.msra.mxu0 0
        %1881 = vmatpush.bf16.xpose.msra.mxu0 %v1872
        %1882 = vmatmul.bf16.gmra.mxu0 %v1869
        %v1883 = vpop.f32.mrf.mxu0
        %v1884 = vadd.f32 0.0, %v1883
        %v1885 = vpop.f32.mrf.mxu0
        %1886 = vdwg.mxu0
        %v1887 = vsel %vm1753, %v1884, -inf
        %1888 = vmax.xlane.f32.xlu0 %v1887
        %v1889 = vpop.xlane.xlu0 %1888
        %v1890 = vsub.f32 %v1884, %v1889
        %v1891 = vmul.f32 %v1890, 1.442695
        %v1892 = vpow.pop %v1891
        %v1893 = vsel %vm1753, %v1892, 0.0
        %1894 = vadd.xlane.f32.xlu0 %v1893
        %v1895 = vpop.xlane.xlu0 %1894
        %v1896 = vrcp.pop %v1895
        %v1897 = vmul.f32 %v1892, %v1896
        %v1898 = vpack.c.bf16 %v1897, %v1897
        %1899 = vrot.lane.b32.xlu0 %v1749, 48
        %v1900 = vpop.permute.xlu0 %1899
        %v1902 = vsel %vm1753, %v1898, 0
        %v1905 = vsel %vm1790, %v1900, 0
        %1907 = vmatpush.bf16.msra.mxu0 0
        %1908 = vmatpush.bf16.msra.mxu0 0
        %1909 = vmatpush.bf16.msra.mxu0 0
        %1910 = vmatpush.bf16.msra.mxu0 0
        %1911 = vmatpush.bf16.msra.mxu0 0
        %1912 = vmatpush.bf16.msra.mxu0 0
        %1913 = vmatpush.bf16.msra.mxu0 0
        %1914 = vmatpush.bf16.msra.mxu0 %v1905
        %1915 = vmatmul.bf16.gmra.mxu0 %v1902
        %v1916 = vpop.f32.mrf.mxu0
        %v1917 = vadd.f32 0.0, %v1916
        %v1918 = vpop.f32.mrf.mxu0
        %1919 = vdwg.mxu0
        %1920 = vrot.lane.b32.xlu0 %v1748, 104
        %v1921 = vpop.permute.xlu0 %1920
        %1922 = vrot.lane.b32.xlu0 %v1749, 72
        %v1923 = vpop.permute.xlu0 %1922
        %v1925 = vsel %vm1753, %v1921, 0
        %v1928 = vsel %vm1753, %v1923, 0
        %1930 = vmatpush.bf16.xpose.msra.mxu0 0
        %1931 = vmatpush.bf16.xpose.msra.mxu0 0
        %1932 = vmatpush.bf16.xpose.msra.mxu0 0
        %1933 = vmatpush.bf16.xpose.msra.mxu0 0
        %1934 = vmatpush.bf16.xpose.msra.mxu0 0
        %1935 = vmatpush.bf16.xpose.msra.mxu0 0
        %1936 = vmatpush.bf16.xpose.msra.mxu0 0
        %1937 = vmatpush.bf16.xpose.msra.mxu0 %v1928
        %1938 = vmatmul.bf16.gmra.mxu0 %v1925
        %v1939 = vpop.f32.mrf.mxu0
        %v1940 = vadd.f32 0.0, %v1939
        %v1941 = vpop.f32.mrf.mxu0
        %1942 = vdwg.mxu0
        %v1943 = vsel %vm1753, %v1940, -inf
        %1944 = vmax.xlane.f32.xlu0 %v1943
        %v1945 = vpop.xlane.xlu0 %1944
        %v1946 = vsub.f32 %v1940, %v1945
        %v1947 = vmul.f32 %v1946, 1.442695
        %v1948 = vpow.pop %v1947
        %v1949 = vsel %vm1753, %v1948, 0.0
        %1950 = vadd.xlane.f32.xlu0 %v1949
        %v1951 = vpop.xlane.xlu0 %1950
        %v1952 = vrcp.pop %v1951
        %v1953 = vmul.f32 %v1948, %v1952
        %v1954 = vpack.c.bf16 %v1953, %v1953
        %1955 = vrot.lane.b32.xlu0 %v1749, 40
        %v1956 = vpop.permute.xlu0 %1955
        %v1958 = vsel %vm1753, %v1954, 0
        %v1961 = vsel %vm1790, %v1956, 0
        %1963 = vmatpush.bf16.msra.mxu0 0
        %1964 = vmatpush.bf16.msra.mxu0 0
        %1965 = vmatpush.bf16.msra.mxu0 0
        %1966 = vmatpush.bf16.msra.mxu0 0
        %1967 = vmatpush.bf16.msra.mxu0 0
        %1968 = vmatpush.bf16.msra.mxu0 0
        %1969 = vmatpush.bf16.msra.mxu0 0
        %1970 = vmatpush.bf16.msra.mxu0 %v1961
        %1971 = vmatmul.bf16.gmra.mxu0 %v1958
        %v1972 = vpop.f32.mrf.mxu0
        %v1973 = vadd.f32 0.0, %v1972
        %v1974 = vpop.f32.mrf.mxu0
        %1975 = vdwg.mxu0
        %1977 = vrot.lane.b32.xlu0 %v1861, 8
        %v1978 = vpop.permute.xlu0 %1977
        %1981 = vrot.lane.b32.xlu0 %v1917, 16
        %v1982 = vpop.permute.xlu0 %1981
        %1985 = vrot.lane.b32.xlu0 %v1973, 24
        %v1986 = vpop.permute.xlu0 %1985
        %v1988 = vsel %vm1753, %v1804, %v1978
        %vm1989 = vcmask 130048
        %v1990 = vsel %vm1989, %v1988, %v1982
        %vm1991 = vcmask 195584
        %v1992 = vsel %vm1991, %v1990, %v1986
        %v1993 = vpack.c.bf16 %v1992, %v1992
        %v1994 = vld [vmem:[%s538] sm:$0xf]
        %v1995 = vld [vmem:[%s538 + $0x4] sm:$0xf]
        %v1996 = vld [vmem:[%s538 + $0x8] sm:$0xf]
        %v1997 = vld [vmem:[%s538 + $0xc] sm:$0xf]
        %v1998 = vperm.slane %v1708, 0
        %v2003 = vunpack.c.l.b16 %v1994
        %v2004 = vunpack.c.l.b16 %v1995
        %v2005 = vunpack.c.l.b16 %v1996
        %v2006 = vunpack.c.l.b16 %v1997
        %v2007 = vpack.c.b16 %v2004, %v2003
        %v2008 = vpack.c.b16 %v2006, %v2005
        %v2012 = vsel %vm1730, %v1993, 0
        %2014 = vmatpush.bf16.msra.mxu0 0
        %2015 = vmatpush.bf16.msra.mxu0 0
        %2016 = vmatpush.bf16.msra.mxu0 0
        %2017 = vmatpush.bf16.msra.mxu0 0
        %2018 = vmatpush.bf16.msra.mxu0 0
        %2019 = vmatpush.bf16.msra.mxu0 0
        %2020 = vmatpush.bf16.msra.mxu0 %v2008
        %2021 = vmatpush.bf16.msra.mxu0 %v2007
        %2022 = vmatmul.bf16.gmra.mxu0 %v2012
        %v2023 = vpop.f32.mrf.mxu0
        %v2024 = vadd.f32 %v1998, %v2023
        %v2025 = vpop.f32.mrf.mxu0
        %2026 = vdwg.mxu0
        %v2027 = vadd.f32 %v1707, %v2024
        %v2028 = vsel %vm1730, %v2027, 0.0
        %2029 = vadd.xlane.f32.xlu0 %v2028
        %v2030 = vpop.xlane.xlu0 %2029
        %v2031 = vrcp.pop 32.0
        %v2032 = vmul.f32 32.0, %v2031
        %v2033 = vsub.f32 1.0, %v2032
        %v2034 = vmul.f32 %v2031, %v2033
        %v2035 = vadd.f32 %v2031, %v2034
        %vm2036 = vweird.f32 %v2031
        %v2037 = vsel %vm2036, %v2031, %v2035
        %v2038 = vmul.f32 %v2030, %v2037
        %v2039 = vsub.f32 %v2027, %v2038
        %v2040 = vmul.f32 %v2039, %v2039
        %v2041 = vsel %vm1730, %v2040, 0.0
        %2042 = vadd.xlane.f32.xlu0 %v2041
        %v2043 = vpop.xlane.xlu0 %2042
        %v2044 = vmul.f32 %v2043, %v2037
        %v2045 = vadd.f32 %v2044, 1e-05
        %v2046 = vrsqrt.pop %v2045
        %v2047 = vmul.f32 %v2046, %v2045
        %v2048 = vmul.f32 %v2047, %v2046
        %v2049 = vmul.f32 0.5, %v2048
        %v2050 = vsub.f32 1.5, %v2049
        %v2051 = vmul.f32 %v2046, %v2050
        %vm2052 = vweird.f32 %v2045
        %vm2053 = vweird.f32 %v2046
        %vm2054 = vmor %vm2052, %vm2053
        %v2055 = vsel %vm2054, %v2046, %v2051
        %v2056 = vmul.f32 %v2039, %v2055
        %v2057 = vperm.slane %v1708, 1
        %v2058 = vmul.f32 %v2056, %v2057
        %v2059 = vperm.slane %v1708, 2
        %v2060 = vadd.f32 %v2058, %v2059
        %v2061 = vpack.c.bf16 %v2060, %v2060
        %v2062 = vld [vmem:[%s543] sm:$0xf]
        %v2063 = vld [vmem:[%s543 + $0x4] sm:$0xf]
        %v2064 = vld [vmem:[%s543 + $0x8] sm:$0xf]
        %v2065 = vld [vmem:[%s543 + $0xc] sm:$0xf]
        %v2066 = vld [vmem:[%s558] sm:$0x1]
        %v2068 = vperm.slane %v2066, 0
        %v2074 = vunpack.c.l.b16 %v2062
        %v2075 = vunpack.c.l.b16 %v2063
        %v2076 = vunpack.c.l.b16 %v2064
        %v2077 = vunpack.c.l.b16 %v2065
        %v2078 = vpack.c.b16 %v2075, %v2074
        %v2079 = vpack.c.b16 %v2077, %v2076
        %v2083 = vsel %vm1730, %v2061, 0
        %2085 = vmatpush.bf16.msra.mxu0 0
        %2086 = vmatpush.bf16.msra.mxu0 0
        %2087 = vmatpush.bf16.msra.mxu0 0
        %2088 = vmatpush.bf16.msra.mxu0 0
        %2089 = vmatpush.bf16.msra.mxu0 0
        %2090 = vmatpush.bf16.msra.mxu0 0
        %2091 = vmatpush.bf16.msra.mxu0 %v2079
        %2092 = vmatpush.bf16.msra.mxu0 %v2078
        %2093 = vmatmul.bf16.gmra.mxu0 %v2083
        %v2094 = vpop.f32.mrf.mxu0
        %v2095 = vadd.f32 %v2068, %v2094
        %v2096 = vpop.f32.mrf.mxu0
        %2097 = vdwg.mxu0
        %v2098 = vmul.f32 %v2095, 0.5
        %v2099 = vmul.f32 %v2095, 0.044715
        %v2100 = vmul.f32 %v2099, %v2095
        %v2101 = vmul.f32 %v2100, %v2095
        %v2102 = vadd.f32 %v2095, %v2101
        %v2103 = vmul.f32 %v2102, 0.7978846
        %v2104 = vtanh.pop %v2103
        %v2105 = vadd.f32 %v2104, 1.0
        %v2106 = vmul.f32 %v2098, %v2105
        %v2107 = vpack.c.bf16 %v2106, %v2106
        %v2108 = vld [vmem:[%s548] sm:$0xf]
        %v2109 = vld [vmem:[%s548 + $0x4] sm:$0xf]
        %v2110 = vld [vmem:[%s548 + $0x8] sm:$0xf]
        %v2111 = vld [vmem:[%s548 + $0xc] sm:$0xf]
        %v2112 = vld [vmem:[%s548 + $0x10] sm:$0xf]
        %v2113 = vld [vmem:[%s548 + $0x14] sm:$0xf]
        %v2114 = vld [vmem:[%s548 + $0x18] sm:$0xf]
        %v2115 = vld [vmem:[%s548 + $0x1c] sm:$0xf]
        %v2116 = vperm.slane %v1708, 3
        %v2125 = vunpack.c.l.b16 %v2108
        %v2126 = vunpack.c.l.b16 %v2109
        %v2127 = vunpack.c.l.b16 %v2110
        %v2128 = vunpack.c.l.b16 %v2111
        %v2129 = vunpack.c.l.b16 %v2112
        %v2130 = vunpack.c.l.b16 %v2113
        %v2131 = vunpack.c.l.b16 %v2114
        %v2132 = vunpack.c.l.b16 %v2115
        %v2133 = vpack.c.b16 %v2126, %v2125
        %v2134 = vpack.c.b16 %v2128, %v2127
        %v2135 = vpack.c.b16 %v2130, %v2129
        %v2136 = vpack.c.b16 %v2132, %v2131
        %vm2141 = vcmask 523264
        %v2143 = vsel %vm2141, %v2107, 0
        %2145 = vmatpush.bf16.msra.mxu0 0
        %2146 = vmatpush.bf16.msra.mxu0 0
        %2147 = vmatpush.bf16.msra.mxu0 0
        %2148 = vmatpush.bf16.msra.mxu0 0
        %2149 = vmatpush.bf16.msra.mxu0 %v2136
        %2150 = vmatpush.bf16.msra.mxu0 %v2135
        %2151 = vmatpush.bf16.msra.mxu0 %v2134
        %2152 = vmatpush.bf16.msra.mxu0 %v2133
        %2153 = vmatmul.bf16.gmra.mxu0 %v2143
        %v2154 = vpop.f32.mrf.mxu0
        %v2155 = vadd.f32 %v2116, %v2154
        %v2156 = vpop.f32.mrf.mxu0
        %2157 = vdwg.mxu0
        %v2158 = vadd.f32 %v2060, %v2155
        %v2159 = vsel %vm1730, %v2158, 0.0
        %2160 = vadd.xlane.f32.xlu0 %v2159
        %v2161 = vpop.xlane.xlu0 %2160
        %v2162 = vmul.f32 %v2161, %v2037
        %v2163 = vsub.f32 %v2158, %v2162
        %v2164 = vmul.f32 %v2163, %v2163
        %v2165 = vsel %vm1730, %v2164, 0.0
        %2166 = vadd.xlane.f32.xlu0 %v2165
        %v2167 = vpop.xlane.xlu0 %2166
        %v2168 = vmul.f32 %v2167, %v2037
        %v2169 = vadd.f32 %v2168, 1e-05
        %v2170 = vrsqrt.pop %v2169
        %v2171 = vmul.f32 %v2170, %v2169
        %v2172 = vmul.f32 %v2171, %v2170
        %v2173 = vmul.f32 0.5, %v2172
        %v2174 = vsub.f32 1.5, %v2173
        %v2175 = vmul.f32 %v2170, %v2174
        %vm2176 = vweird.f32 %v2169
        %vm2177 = vweird.f32 %v2170
        %vm2178 = vmor %vm2176, %vm2177
        %v2179 = vsel %vm2178, %v2170, %v2175
        %v2180 = vmul.f32 %v2163, %v2179
        %v2181 = vperm.slane %v1708, 4
        %v2182 = vmul.f32 %v2180, %v2181
        %v2183 = vperm.slane %v1708, 5
        %v2184 = vadd.f32 %v2182, %v2183
        %2185 = vst.msk [vmem:[#allocation2] sm:$0xff] %vm1730, %v2184
        %p2186 = scmp.eq.s32.totalorder %s26, 1
        // Predicated region
        $region81: #{tpu_custom_call.1} parent=75 // pred_check
          %p2187 = pneg %p2186
        $region82: #{tpu_custom_call.1} parent=75 // pred_check_branch
          %2189 = sbr.rel (%p2187) target = $region84
        $region83: #{tpu_custom_call.1} parent=75 // pred_region
          %v2190 = vld [vmem:[#allocation2] sm:$0xff]
          %v2191 = vpack.c.bf16 %v2190, %v2190
          %v2192 = vld [vmem:[%s12] sm:$0xf]
          %v2193 = vld [vmem:[%s12 + $0x4] sm:$0xf]
          %v2194 = vld [vmem:[%s12 + $0x8] sm:$0xf]
          %v2195 = vld [vmem:[%s12 + $0xc] sm:$0xf]
          %v2196 = vld [vmem:[%s13] sm:$0x1]
          %v2198 = vperm.slane %v2196, 0
          %v2204 = vunpack.c.l.b16 %v2192
          %v2205 = vunpack.c.l.b16 %v2193
          %v2206 = vunpack.c.l.b16 %v2194
          %v2207 = vunpack.c.l.b16 %v2195
          %v2208 = vpack.c.b16 %v2205, %v2204
          %v2209 = vpack.c.b16 %v2207, %v2206
          %v2213 = vsel %vm1730, %v2191, 0
          %2215 = vmatpush.bf16.msra.mxu0 0
          %2216 = vmatpush.bf16.msra.mxu0 0
          %2217 = vmatpush.bf16.msra.mxu0 0
          %2218 = vmatpush.bf16.msra.mxu0 0
          %2219 = vmatpush.bf16.msra.mxu0 0
          %2220 = vmatpush.bf16.msra.mxu0 0
          %2221 = vmatpush.bf16.msra.mxu0 %v2209
          %2222 = vmatpush.bf16.msra.mxu0 %v2208
          %2223 = vmatmul.bf16.gmra.mxu0 %v2213
          %v2224 = vpop.f32.mrf.mxu0
          %v2225 = vadd.f32 %v2198, %v2224
          %v2226 = vpop.f32.mrf.mxu0
          %2227 = vdwg.mxu0
          %v2228 = vlaneseq
          %v2229 = vand.u32 %v2228, 127
          %vm2230 = vcmp.eq.s32.totalorder %v2229, 16
          %v2231 = vtanh.pop %v2225
          %v2232 = vsel %vm2230, %v2231, %v2225
          %2233 = vst [vmem:[#allocation3] sm:$0xff] %v2232
        $region84: #{tpu_custom_call.1} parent=75 // pred_fallthru
          _
        // Predicated region
        $region85: #{tpu_custom_call.1} parent=75 // pred_check
          %p2234 = pneg %p368
        $region86: #{tpu_custom_call.1} parent=75 // pred_check_branch
          %2236 = sbr.rel (%p2234) target = $region88
        $region87: #{tpu_custom_call.1} parent=75 // pred_region
          %2238 = vsyncadd [#allocation4], 0
          %s2240 = sshll.u32 [#allocation3], 4
          %s2241 = int_to_ptr.vmem [resolvable:$true] %s2240
          %s2242 = sshll.u32 %s14, 4
          %s2243 = int_to_ptr.hbm [resolvable:$true] %s2242
          %2245 = dma.vmem_to_hbm [thread:$0]  %s2241, 128, %s2243, [#allocation4]
        $region88: #{tpu_custom_call.1} parent=75 // pred_fallthru
          _
        // Predicated region
        $region89: #{tpu_custom_call.1} parent=75 // pred_check
          %p2246 = pneg %p368
        $region90: #{tpu_custom_call.1} parent=75 // pred_check_branch
          %2248 = sbr.rel (%p2246) target = $region92
        $region91: #{tpu_custom_call.1} parent=75 // pred_region
          %2250 = dma.done [#allocation4], 128
        $region92: #{tpu_custom_call.1} parent=75 // pred_fallthru
          _
      $region76: #{tpu_custom_call.1} parent=5 // pred_fallthru
        _
      %p2251 = scmp.le.s32.totalorder 2, %s21
      // Predicated region
      $region93: #{tpu_custom_call.1} parent=5 // pred_check
        %p2252 = pneg %p2251
      $region94: #{tpu_custom_call.1} parent=5 // pred_check_branch
        %2254 = sbr.rel (%p2252) target = $region96
      $region95: #{tpu_custom_call.1} parent=5 // pred_region
        %s2255 = ssub.s32 %s21, 2
      $region96: #{tpu_custom_call.1} parent=5 // pred_fallthru
        _
    $region6: #{tpu_custom_call.1} parent=1 // loop_footer
      %s25 = sadd.s32 1, %s21
    $region7: #{tpu_custom_call.1} parent=1 // loop_footer_branch
      %20 = sbr.rel target = $region3
    $region8: #{tpu_custom_call.1} parent=1 // loop_exit
      _
    %2256 = vsyncpa [#allocation4], 1
    %s2257 = scalar_lea.sflag [#allocation4], 1
    %2258 = vsyncpa %s2257, 1

</llo_original>
